<compile_context>
chip_gen: v5e
topology: v5e:2x2
jax: 0.10.0
libtpu: 0.0.40
codegen_flags: <defaults>
</compile_context>

<pallas_src>
import functools

import jax
import jax.numpy as jnp
from jax.experimental import pallas as pl
from jax.experimental.pallas import tpu as pltpu


def _round_up(x, m):
    return (x + m - 1) // m * m


# ----------------------------------------------------------------------------
# Kernel 1/2: fused 3x3 conv (valid) + bias + ReLU + 2x2 maxpool (floor mode)
# ----------------------------------------------------------------------------
def _conv_relu_pool_kernel(x_ref, w_ref, b_ref, o_ref, *, wp, cout):
    """One pooled output row per grid step.

    x_ref: (1, H, P, 2*Cin)  column-paired input image (resident in VMEM, fetched
                             once per batch index because its block index ignores ph)
    w_ref: (6, 2*Cin, 2*Cout) paired tap weights, tap index = di*2 + p  (bf16)
    b_ref: (1, 2*Cout)        bias duplicated for the even/odd output-column phases
    o_ref: (1, 1, Wp, Cout)   pooled + ReLU'd output row
    """
    ph = pl.program_id(1)
    cdtype = w_ref.dtype

    def conv_row(h):  # conv output row h, both column phases: (Wp, 2*Cout) f32
        acc = jnp.zeros((wp, 2 * cout), jnp.float32)
        for di in range(3):          # kernel height (kernel_size=3)
            for p in range(2):       # paired-column tap
                lhs = x_ref[0, h + di, pl.ds(p, wp), :].astype(cdtype)
                acc = acc + jnp.dot(lhs, w_ref[di * 2 + p],
                                    preferred_element_type=jnp.float32)
        return acc

    # vertical 2x pool (max of the two conv rows), then bias + ReLU (f32 epilogue)
    r = jnp.maximum(conv_row(2 * ph), conv_row(2 * ph + 1))
    r = jnp.maximum(r + b_ref[...], 0.0)
    # horizontal 2x pool = max of the even/odd phase lane groups
    o_ref[0, 0, :, :] = jnp.maximum(r[:, :cout], r[:, cout:])


def conv_relu_pool(x_paired, w_taps, b_pair, *, orig_w):
    """x_paired: (N, H, P, 2*Cin) column-paired NHWC input; orig_w: un-paired width."""
    n, h, p, cin2 = x_paired.shape
    cout2 = w_taps.shape[-1]
    cout = cout2 // 2
    ho, wo = h - 2, orig_w - 2
    hp, wp = ho // 2, wo // 2
    assert p >= wp + 1

    kernel = functools.partial(_conv_relu_pool_kernel, wp=wp, cout=cout)
    return pl.pallas_call(
        kernel,
        out_shape=jax.ShapeDtypeStruct((n, hp, wp, cout), jnp.float32),
        grid=(n, hp),
        in_specs=[
            pl.BlockSpec((1, h, p, cin2), lambda i, j: (i, 0, 0, 0)),
            pl.BlockSpec(tuple(w_taps.shape), lambda i, j: (0, 0, 0)),
            pl.BlockSpec((1, cout2), lambda i, j: (0, 0)),
        ],
        out_specs=pl.BlockSpec((1, 1, wp, cout), lambda i, j: (i, j, 0, 0)),
        compiler_params=pltpu.CompilerParams(
            dimension_semantics=("parallel", "parallel"),
            vmem_limit_bytes=32 * 1024 * 1024,   # fits v7x scoped VMEM
        ),
    )(x_paired.astype(jnp.float32), w_taps,
      b_pair.reshape(1, cout2).astype(jnp.float32))


# ----------------------------------------------------------------------------
# Kernel 3: fused fc1 (+ReLU) + fc2 (fc2 padded to 128 lane-dense output cols)
# ----------------------------------------------------------------------------
def _fc_fused_kernel(x_ref, w1_ref, b1_ref, w2_ref, b2_ref, o_ref):
    h = jnp.dot(x_ref[...].astype(w1_ref.dtype), w1_ref[...],
                preferred_element_type=jnp.float32)
    h = jnp.maximum(h + b1_ref[...], 0.0)                     # f32 epilogue
    o = jnp.dot(h.astype(w2_ref.dtype), w2_ref[...],
                preferred_element_type=jnp.float32)
    o_ref[...] = (o + b2_ref[...]).astype(o_ref.dtype)


def fc_fused(x, w1, b1, w2p, b2p, *, block_m=512):
    m, k = x.shape
    h1 = w1.shape[1]
    h2 = w2p.shape[1]
    tm = min(block_m, _round_up(m, 8))
    mp = _round_up(m, tm)
    if mp != m:
        x = jnp.pad(x, ((0, mp - m), (0, 0)))
    out = pl.pallas_call(
        _fc_fused_kernel,
        out_shape=jax.ShapeDtypeStruct((mp, h2), jnp.float32),
        grid=(mp // tm,),
        in_specs=[
            pl.BlockSpec((tm, k), lambda i: (i, 0)),
            pl.BlockSpec((k, h1), lambda i: (0, 0)),
            pl.BlockSpec((1, h1), lambda i: (0, 0)),
            pl.BlockSpec((h1, h2), lambda i: (0, 0)),
            pl.BlockSpec((1, h2), lambda i: (0, 0)),
        ],
        out_specs=pl.BlockSpec((tm, h2), lambda i: (i, 0)),
        compiler_params=pltpu.CompilerParams(
            dimension_semantics=("parallel",),
            vmem_limit_bytes=32 * 1024 * 1024,
        ),
    )(x.astype(jnp.float32), w1, b1.reshape(1, h1).astype(jnp.float32),
      w2p, b2p.reshape(1, h2).astype(jnp.float32))
    return out[:m]


# ----------------------------------------------------------------------------
# Parameters (PyTorch convention) and one-time kernel-ready re-layout
# ----------------------------------------------------------------------------
def init_params(key):
    k1, k2, k3, k4, k5, k6, k7, k8 = jax.random.split(key, 8)
    return {
        # conv weights in HWIO (kh, kw, cin, cout); PyTorch OIHW would be transposed here
        "w1": jax.random.normal(k1, (3, 3, 1, 32), jnp.float32) * 0.1,
        "b1": jax.random.normal(k2, (32,), jnp.float32) * 0.01,
        "w2": jax.random.normal(k3, (3, 3, 32, 64), jnp.float32) * 0.05,
        "b2": jax.random.normal(k4, (64,), jnp.float32) * 0.01,
        # fc weights stored (in, out); fc1 rows in PyTorch (c, h, w) flatten order
        "w_fc1": jax.random.normal(k5, (64 * 5 * 5, 128), jnp.float32) * 0.02,
        "b_fc1": jax.random.normal(k6, (128,), jnp.float32) * 0.01,
        "w_fc2": jax.random.normal(k7, (128, 10), jnp.float32) * 0.05,
        "b_fc2": jax.random.normal(k8, (10,), jnp.float32) * 0.01,
    }


def _pair_conv_weights(w_hwio):
    """Expand (3,3,Cin,Cout) to paired-column taps (6, 2*Cin, 2*Cout).

    Output column phase k in {0,1} and paired-column tap p in {0,1}: the weight block
    [m*Cin:(m+1)*Cin, k*Cout:(k+1)*Cout] of tap (di, p) is W[di, 2p+m-k] when valid.
    """
    kh, kw, cin, cout = w_hwio.shape
    wt = jnp.zeros((kh, 2, 2 * cin, 2 * cout), w_hwio.dtype)
    for p in range(2):
        for m in range(2):
            for k in range(2):
                dj = 2 * p + m - k
                if 0 <= dj < kw:
                    wt = wt.at[:, p, m * cin:(m + 1) * cin,
                               k * cout:(k + 1) * cout].set(w_hwio[:, dj, :, :])
    return wt.reshape(kh * 2, 2 * cin, 2 * cout)


def prepare_params(p):
    """One-time re-layout of PyTorch-convention params into kernel-ready form."""
    # fc1 rows: PyTorch (c,h,w) flatten order -> NHWC (h,w,c) order (kills the transpose)
    w_fc1 = p["w_fc1"].reshape(64, 5, 5, 128).transpose(1, 2, 0, 3).reshape(1600, 128)
    return {
        "w1p": _pair_conv_weights(p["w1"]).astype(jnp.bfloat16),     # (6,  2,  64)
        "b1p": jnp.concatenate([p["b1"], p["b1"]]).astype(jnp.float32),
        "w2p": _pair_conv_weights(p["w2"]).astype(jnp.bfloat16),     # (6, 64, 128)
        "b2p": jnp.concatenate([p["b2"], p["b2"]]).astype(jnp.float32),
        "w_fc1": w_fc1.astype(jnp.bfloat16),
        "b_fc1": p["b_fc1"].astype(jnp.float32),
        # pad fc2 to 128 output columns for lane-dense stores; logits sliced outside
        "w_fc2p": jnp.pad(p["w_fc2"], ((0, 0), (0, 118))).astype(jnp.bfloat16),
        "b_fc2p": jnp.pad(p["b_fc2"], ((0, 118),)).astype(jnp.float32),
    }


# ----------------------------------------------------------------------------
# Forward pass
# ----------------------------------------------------------------------------
@jax.jit
def cnn_forward(x_nchw, kparams):
    n = x_nchw.shape[0]
    x = x_nchw.astype(jnp.float32).reshape(n, 28, 28, 1)   # NCHW->NHWC (free, C=1)
    x = x.reshape(n, 28, 14, 2)                            # pair adjacent W columns (free)
    x = conv_relu_pool(x, kparams["w1p"], kparams["b1p"], orig_w=28)   # (N,13,13,32)
    # pad W 13->14 (padded column is never read) and pair columns for stage 2
    x = jnp.pad(x, ((0, 0), (0, 0), (0, 1), (0, 0))).reshape(n, 13, 7, 64)
    x = conv_relu_pool(x, kparams["w2p"], kparams["b2p"], orig_w=13)   # (N,5,5,64)
    x = x.reshape(n, 5 * 5 * 64)                           # NHWC flatten (w_fc1 permuted)
    logits = fc_fused(x, kparams["w_fc1"], kparams["b_fc1"],
                      kparams["w_fc2p"], kparams["b_fc2p"])            # (N,128)
    return logits[:, :10]


# ----------------------------------------------------------------------------
# Plain-JAX reference (PyTorch semantics) for a sanity check
# ----------------------------------------------------------------------------
def _reference_forward(x_nchw, p):
    x = jnp.transpose(x_nchw, (0, 2, 3, 1)).astype(jnp.float32)

    def conv_relu(x, w, b):
        kh, kw, _, _ = w.shape
        n, h, ww, _ = x.shape
        ho, wo = h - kh + 1, ww - kw + 1
        out = 0.0
        for di in range(kh):
            for dj in range(kw):
                out = out + jnp.einsum("nhwc,cd->nhwd",
                                       x[:, di:di + ho, dj:dj + wo, :], w[di, dj])
        return jnp.maximum(out + b, 0.0)

    def pool(x):
        n, h, ww, c = x.shape
        hh, wp = h // 2, ww // 2
        return x[:, :2 * hh, :2 * wp, :].reshape(n, hh, 2, wp, 2, c).max(axis=(2, 4))

    x = pool(conv_relu(x, p["w1"], p["b1"]))
    x = pool(conv_relu(x, p["w2"], p["b2"]))
    n = x.shape[0]
    x = jnp.transpose(x, (0, 3, 1, 2)).reshape(n, 64 * 5 * 5)   # PyTorch (c,h,w) flatten
    x = jnp.maximum(x @ p["w_fc1"] + p["b_fc1"], 0.0)
    return x @ p["w_fc2"] + p["b_fc2"]


if __name__ == "__main__":
    key = jax.random.PRNGKey(0)
    k_params, k_x = jax.random.split(key)
    params = init_params(k_params)
    kparams = prepare_params(params)

    # MNIST-like input implied by the module: 1 channel, 28x28 (so fc1 sees 64*5*5)
    x = jax.random.normal(k_x, (2, 1, 28, 28), jnp.float32)

    out = cnn_forward(x, kparams)
    jax.block_until_ready(out)
    assert out.shape == (2, 10) and out.dtype == jnp.float32

    ref = _reference_forward(x, params)
    err = float(jnp.max(jnp.abs(out - ref)))
    assert err < 5e-2, f"mismatch vs reference: max abs err = {err}"

    print("KERNEL_OK")
</pallas_src>

<mosaic_0001>
module attributes {stable_mosaic.version = 11 : i64} {
  func.func @_conv_relu_pool_kernel(%arg0: i32, %arg1: i32, %arg2: memref<1x28x14x2xf32, #tpu.memory_space<vmem>>, %arg3: memref<6x2x64xbf16, #tpu.memory_space<vmem>>, %arg4: memref<1x64xf32, #tpu.memory_space<vmem>>, %arg5: memref<1x1x13x32xf32, #tpu.memory_space<vmem>>) attributes {dimension_semantics = [#tpu.dimension_semantics<parallel>, #tpu.dimension_semantics<parallel>], iteration_bounds = array<i64: 2, 13>, scalar_prefetch = 0 : i64, scratch_operands = 0 : i64, tpu.core_type = #tpu.core_type<tc>, window_params = [{transform_indices = @transform_0, window_bounds = array<i64: 1, 28, 14, 2>}, {pipeline_mode = #tpu.pipeline_mode<synchronous>, transform_indices = @transform_1, window_bounds = array<i64: 6, 2, 64>}, {pipeline_mode = #tpu.pipeline_mode<synchronous>, transform_indices = @transform_2, window_bounds = array<i64: 1, 64>}, {transform_indices = @transform_3, window_bounds = array<i64: 1, 1, 13, 32>}]} {
    %c2_i32 = arith.constant 2 : i32
    %0 = arith.muli %c2_i32, %arg1 : i32
    %cst = arith.constant 0.000000e+00 : f32
    %1 = vector.broadcast %cst : f32 to vector<13x64xf32>
    %c0_i32 = arith.constant 0 : i32
    %2 = arith.addi %0, %c0_i32 : i32
    %c0 = arith.constant 0 : index
    %3 = arith.index_cast %2 : i32 to index
    %c0_0 = arith.constant 0 : index
    %c0_1 = arith.constant 0 : index
    %4 = vector.load %arg2[%c0, %3, %c0_0, %c0_1] : memref<1x28x14x2xf32, #tpu.memory_space<vmem>>, vector<1x1x13x2xf32>
    %5 = vector.shape_cast %4 : vector<1x1x13x2xf32> to vector<13x2xf32>
    %6 = arith.truncf %5 : vector<13x2xf32> to vector<13x2xbf16>
    %c0_2 = arith.constant 0 : index
    %c0_3 = arith.constant 0 : index
    %c0_4 = arith.constant 0 : index
    %7 = vector.load %arg3[%c0_2, %c0_3, %c0_4] : memref<6x2x64xbf16, #tpu.memory_space<vmem>>, vector<1x2x64xbf16>
    %8 = vector.shape_cast %7 : vector<1x2x64xbf16> to vector<2x64xbf16>
    %cst_5 = arith.constant dense<0.000000e+00> : vector<13x64xf32>
    %9 = tpu.matmul %6, %8, %cst_5 {dimension_numbers = #tpu.dot_dimension_numbers<[1], [0], [0], [1], [0, 0, 1, 1], [], []>} : vector<13x2xbf16>, vector<2x64xbf16>, vector<13x64xf32> -> vector<13x64xf32>
    %10 = arith.addf %1, %9 : vector<13x64xf32>
    %c0_i32_6 = arith.constant 0 : i32
    %11 = arith.addi %0, %c0_i32_6 : i32
    %c0_7 = arith.constant 0 : index
    %12 = arith.index_cast %11 : i32 to index
    %c1 = arith.constant 1 : index
    %c0_8 = arith.constant 0 : index
    %13 = vector.load %arg2[%c0_7, %12, %c1, %c0_8] : memref<1x28x14x2xf32, #tpu.memory_space<vmem>>, vector<1x1x13x2xf32>
    %14 = vector.shape_cast %13 : vector<1x1x13x2xf32> to vector<13x2xf32>
    %15 = arith.truncf %14 : vector<13x2xf32> to vector<13x2xbf16>
    %c1_9 = arith.constant 1 : index
    %c0_10 = arith.constant 0 : index
    %c0_11 = arith.constant 0 : index
    %16 = vector.load %arg3[%c1_9, %c0_10, %c0_11] : memref<6x2x64xbf16, #tpu.memory_space<vmem>>, vector<1x2x64xbf16>
    %17 = vector.shape_cast %16 : vector<1x2x64xbf16> to vector<2x64xbf16>
    %cst_12 = arith.constant dense<0.000000e+00> : vector<13x64xf32>
    %18 = tpu.matmul %15, %17, %cst_12 {dimension_numbers = #tpu.dot_dimension_numbers<[1], [0], [0], [1], [0, 0, 1, 1], [], []>} : vector<13x2xbf16>, vector<2x64xbf16>, vector<13x64xf32> -> vector<13x64xf32>
    %19 = arith.addf %10, %18 : vector<13x64xf32>
    %c1_i32 = arith.constant 1 : i32
    %20 = arith.addi %0, %c1_i32 : i32
    %c0_13 = arith.constant 0 : index
    %21 = arith.index_cast %20 : i32 to index
    %c0_14 = arith.constant 0 : index
    %c0_15 = arith.constant 0 : index
    %22 = vector.load %arg2[%c0_13, %21, %c0_14, %c0_15] : memref<1x28x14x2xf32, #tpu.memory_space<vmem>>, vector<1x1x13x2xf32>
    %23 = vector.shape_cast %22 : vector<1x1x13x2xf32> to vector<13x2xf32>
    %24 = arith.truncf %23 : vector<13x2xf32> to vector<13x2xbf16>
    %c2 = arith.constant 2 : index
    %c0_16 = arith.constant 0 : index
    %c0_17 = arith.constant 0 : index
    %25 = vector.load %arg3[%c2, %c0_16, %c0_17] : memref<6x2x64xbf16, #tpu.memory_space<vmem>>, vector<1x2x64xbf16>
    %26 = vector.shape_cast %25 : vector<1x2x64xbf16> to vector<2x64xbf16>
    %cst_18 = arith.constant dense<0.000000e+00> : vector<13x64xf32>
    %27 = tpu.matmul %24, %26, %cst_18 {dimension_numbers = #tpu.dot_dimension_numbers<[1], [0], [0], [1], [0, 0, 1, 1], [], []>} : vector<13x2xbf16>, vector<2x64xbf16>, vector<13x64xf32> -> vector<13x64xf32>
    %28 = arith.addf %19, %27 : vector<13x64xf32>
    %c1_i32_19 = arith.constant 1 : i32
    %29 = arith.addi %0, %c1_i32_19 : i32
    %c0_20 = arith.constant 0 : index
    %30 = arith.index_cast %29 : i32 to index
    %c1_21 = arith.constant 1 : index
    %c0_22 = arith.constant 0 : index
    %31 = vector.load %arg2[%c0_20, %30, %c1_21, %c0_22] : memref<1x28x14x2xf32, #tpu.memory_space<vmem>>, vector<1x1x13x2xf32>
    %32 = vector.shape_cast %31 : vector<1x1x13x2xf32> to vector<13x2xf32>
    %33 = arith.truncf %32 : vector<13x2xf32> to vector<13x2xbf16>
    %c3 = arith.constant 3 : index
    %c0_23 = arith.constant 0 : index
    %c0_24 = arith.constant 0 : index
    %34 = vector.load %arg3[%c3, %c0_23, %c0_24] : memref<6x2x64xbf16, #tpu.memory_space<vmem>>, vector<1x2x64xbf16>
    %35 = vector.shape_cast %34 : vector<1x2x64xbf16> to vector<2x64xbf16>
    %cst_25 = arith.constant dense<0.000000e+00> : vector<13x64xf32>
    %36 = tpu.matmul %33, %35, %cst_25 {dimension_numbers = #tpu.dot_dimension_numbers<[1], [0], [0], [1], [0, 0, 1, 1], [], []>} : vector<13x2xbf16>, vector<2x64xbf16>, vector<13x64xf32> -> vector<13x64xf32>
    %37 = arith.addf %28, %36 : vector<13x64xf32>
    %c2_i32_26 = arith.constant 2 : i32
    %38 = arith.addi %0, %c2_i32_26 : i32
    %c0_27 = arith.constant 0 : index
    %39 = arith.index_cast %38 : i32 to index
    %c0_28 = arith.constant 0 : index
    %c0_29 = arith.constant 0 : index
    %40 = vector.load %arg2[%c0_27, %39, %c0_28, %c0_29] : memref<1x28x14x2xf32, #tpu.memory_space<vmem>>, vector<1x1x13x2xf32>
    %41 = vector.shape_cast %40 : vector<1x1x13x2xf32> to vector<13x2xf32>
    %42 = arith.truncf %41 : vector<13x2xf32> to vector<13x2xbf16>
    %c4 = arith.constant 4 : index
    %c0_30 = arith.constant 0 : index
    %c0_31 = arith.constant 0 : index
    %43 = vector.load %arg3[%c4, %c0_30, %c0_31] : memref<6x2x64xbf16, #tpu.memory_space<vmem>>, vector<1x2x64xbf16>
    %44 = vector.shape_cast %43 : vector<1x2x64xbf16> to vector<2x64xbf16>
    %cst_32 = arith.constant dense<0.000000e+00> : vector<13x64xf32>
    %45 = tpu.matmul %42, %44, %cst_32 {dimension_numbers = #tpu.dot_dimension_numbers<[1], [0], [0], [1], [0, 0, 1, 1], [], []>} : vector<13x2xbf16>, vector<2x64xbf16>, vector<13x64xf32> -> vector<13x64xf32>
    %46 = arith.addf %37, %45 : vector<13x64xf32>
    %c2_i32_33 = arith.constant 2 : i32
    %47 = arith.addi %0, %c2_i32_33 : i32
    %c0_34 = arith.constant 0 : index
    %48 = arith.index_cast %47 : i32 to index
    %c1_35 = arith.constant 1 : index
    %c0_36 = arith.constant 0 : index
    %49 = vector.load %arg2[%c0_34, %48, %c1_35, %c0_36] : memref<1x28x14x2xf32, #tpu.memory_space<vmem>>, vector<1x1x13x2xf32>
    %50 = vector.shape_cast %49 : vector<1x1x13x2xf32> to vector<13x2xf32>
    %51 = arith.truncf %50 : vector<13x2xf32> to vector<13x2xbf16>
    %c5 = arith.constant 5 : index
    %c0_37 = arith.constant 0 : index
    %c0_38 = arith.constant 0 : index
    %52 = vector.load %arg3[%c5, %c0_37, %c0_38] : memref<6x2x64xbf16, #tpu.memory_space<vmem>>, vector<1x2x64xbf16>
    %53 = vector.shape_cast %52 : vector<1x2x64xbf16> to vector<2x64xbf16>
    %cst_39 = arith.constant dense<0.000000e+00> : vector<13x64xf32>
    %54 = tpu.matmul %51, %53, %cst_39 {dimension_numbers = #tpu.dot_dimension_numbers<[1], [0], [0], [1], [0, 0, 1, 1], [], []>} : vector<13x2xbf16>, vector<2x64xbf16>, vector<13x64xf32> -> vector<13x64xf32>
    %55 = arith.addf %46, %54 : vector<13x64xf32>
    %c2_i32_40 = arith.constant 2 : i32
    %56 = arith.muli %c2_i32_40, %arg1 : i32
    %c1_i32_41 = arith.constant 1 : i32
    %57 = arith.addi %56, %c1_i32_41 : i32
    %cst_42 = arith.constant 0.000000e+00 : f32
    %58 = vector.broadcast %cst_42 : f32 to vector<13x64xf32>
    %c0_i32_43 = arith.constant 0 : i32
    %59 = arith.addi %57, %c0_i32_43 : i32
    %c0_44 = arith.constant 0 : index
    %60 = arith.index_cast %59 : i32 to index
    %c0_45 = arith.constant 0 : index
    %c0_46 = arith.constant 0 : index
    %61 = vector.load %arg2[%c0_44, %60, %c0_45, %c0_46] : memref<1x28x14x2xf32, #tpu.memory_space<vmem>>, vector<1x1x13x2xf32>
    %62 = vector.shape_cast %61 : vector<1x1x13x2xf32> to vector<13x2xf32>
    %63 = arith.truncf %62 : vector<13x2xf32> to vector<13x2xbf16>
    %c0_47 = arith.constant 0 : index
    %c0_48 = arith.constant 0 : index
    %c0_49 = arith.constant 0 : index
    %64 = vector.load %arg3[%c0_47, %c0_48, %c0_49] : memref<6x2x64xbf16, #tpu.memory_space<vmem>>, vector<1x2x64xbf16>
    %65 = vector.shape_cast %64 : vector<1x2x64xbf16> to vector<2x64xbf16>
    %cst_50 = arith.constant dense<0.000000e+00> : vector<13x64xf32>
    %66 = tpu.matmul %63, %65, %cst_50 {dimension_numbers = #tpu.dot_dimension_numbers<[1], [0], [0], [1], [0, 0, 1, 1], [], []>} : vector<13x2xbf16>, vector<2x64xbf16>, vector<13x64xf32> -> vector<13x64xf32>
    %67 = arith.addf %58, %66 : vector<13x64xf32>
    %c0_i32_51 = arith.constant 0 : i32
    %68 = arith.addi %57, %c0_i32_51 : i32
    %c0_52 = arith.constant 0 : index
    %69 = arith.index_cast %68 : i32 to index
    %c1_53 = arith.constant 1 : index
    %c0_54 = arith.constant 0 : index
    %70 = vector.load %arg2[%c0_52, %69, %c1_53, %c0_54] : memref<1x28x14x2xf32, #tpu.memory_space<vmem>>, vector<1x1x13x2xf32>
    %71 = vector.shape_cast %70 : vector<1x1x13x2xf32> to vector<13x2xf32>
    %72 = arith.truncf %71 : vector<13x2xf32> to vector<13x2xbf16>
    %c1_55 = arith.constant 1 : index
    %c0_56 = arith.constant 0 : index
    %c0_57 = arith.constant 0 : index
    %73 = vector.load %arg3[%c1_55, %c0_56, %c0_57] : memref<6x2x64xbf16, #tpu.memory_space<vmem>>, vector<1x2x64xbf16>
    %74 = vector.shape_cast %73 : vector<1x2x64xbf16> to vector<2x64xbf16>
    %cst_58 = arith.constant dense<0.000000e+00> : vector<13x64xf32>
    %75 = tpu.matmul %72, %74, %cst_58 {dimension_numbers = #tpu.dot_dimension_numbers<[1], [0], [0], [1], [0, 0, 1, 1], [], []>} : vector<13x2xbf16>, vector<2x64xbf16>, vector<13x64xf32> -> vector<13x64xf32>
    %76 = arith.addf %67, %75 : vector<13x64xf32>
    %c1_i32_59 = arith.constant 1 : i32
    %77 = arith.addi %57, %c1_i32_59 : i32
    %c0_60 = arith.constant 0 : index
    %78 = arith.index_cast %77 : i32 to index
    %c0_61 = arith.constant 0 : index
    %c0_62 = arith.constant 0 : index
    %79 = vector.load %arg2[%c0_60, %78, %c0_61, %c0_62] : memref<1x28x14x2xf32, #tpu.memory_space<vmem>>, vector<1x1x13x2xf32>
    %80 = vector.shape_cast %79 : vector<1x1x13x2xf32> to vector<13x2xf32>
    %81 = arith.truncf %80 : vector<13x2xf32> to vector<13x2xbf16>
    %c2_63 = arith.constant 2 : index
    %c0_64 = arith.constant 0 : index
    %c0_65 = arith.constant 0 : index
    %82 = vector.load %arg3[%c2_63, %c0_64, %c0_65] : memref<6x2x64xbf16, #tpu.memory_space<vmem>>, vector<1x2x64xbf16>
    %83 = vector.shape_cast %82 : vector<1x2x64xbf16> to vector<2x64xbf16>
    %cst_66 = arith.constant dense<0.000000e+00> : vector<13x64xf32>
    %84 = tpu.matmul %81, %83, %cst_66 {dimension_numbers = #tpu.dot_dimension_numbers<[1], [0], [0], [1], [0, 0, 1, 1], [], []>} : vector<13x2xbf16>, vector<2x64xbf16>, vector<13x64xf32> -> vector<13x64xf32>
    %85 = arith.addf %76, %84 : vector<13x64xf32>
    %c1_i32_67 = arith.constant 1 : i32
    %86 = arith.addi %57, %c1_i32_67 : i32
    %c0_68 = arith.constant 0 : index
    %87 = arith.index_cast %86 : i32 to index
    %c1_69 = arith.constant 1 : index
    %c0_70 = arith.constant 0 : index
    %88 = vector.load %arg2[%c0_68, %87, %c1_69, %c0_70] : memref<1x28x14x2xf32, #tpu.memory_space<vmem>>, vector<1x1x13x2xf32>
    %89 = vector.shape_cast %88 : vector<1x1x13x2xf32> to vector<13x2xf32>
    %90 = arith.truncf %89 : vector<13x2xf32> to vector<13x2xbf16>
    %c3_71 = arith.constant 3 : index
    %c0_72 = arith.constant 0 : index
    %c0_73 = arith.constant 0 : index
    %91 = vector.load %arg3[%c3_71, %c0_72, %c0_73] : memref<6x2x64xbf16, #tpu.memory_space<vmem>>, vector<1x2x64xbf16>
    %92 = vector.shape_cast %91 : vector<1x2x64xbf16> to vector<2x64xbf16>
    %cst_74 = arith.constant dense<0.000000e+00> : vector<13x64xf32>
    %93 = tpu.matmul %90, %92, %cst_74 {dimension_numbers = #tpu.dot_dimension_numbers<[1], [0], [0], [1], [0, 0, 1, 1], [], []>} : vector<13x2xbf16>, vector<2x64xbf16>, vector<13x64xf32> -> vector<13x64xf32>
    %94 = arith.addf %85, %93 : vector<13x64xf32>
    %c2_i32_75 = arith.constant 2 : i32
    %95 = arith.addi %57, %c2_i32_75 : i32
    %c0_76 = arith.constant 0 : index
    %96 = arith.index_cast %95 : i32 to index
    %c0_77 = arith.constant 0 : index
    %c0_78 = arith.constant 0 : index
    %97 = vector.load %arg2[%c0_76, %96, %c0_77, %c0_78] : memref<1x28x14x2xf32, #tpu.memory_space<vmem>>, vector<1x1x13x2xf32>
    %98 = vector.shape_cast %97 : vector<1x1x13x2xf32> to vector<13x2xf32>
    %99 = arith.truncf %98 : vector<13x2xf32> to vector<13x2xbf16>
    %c4_79 = arith.constant 4 : index
    %c0_80 = arith.constant 0 : index
    %c0_81 = arith.constant 0 : index
    %100 = vector.load %arg3[%c4_79, %c0_80, %c0_81] : memref<6x2x64xbf16, #tpu.memory_space<vmem>>, vector<1x2x64xbf16>
    %101 = vector.shape_cast %100 : vector<1x2x64xbf16> to vector<2x64xbf16>
    %cst_82 = arith.constant dense<0.000000e+00> : vector<13x64xf32>
    %102 = tpu.matmul %99, %101, %cst_82 {dimension_numbers = #tpu.dot_dimension_numbers<[1], [0], [0], [1], [0, 0, 1, 1], [], []>} : vector<13x2xbf16>, vector<2x64xbf16>, vector<13x64xf32> -> vector<13x64xf32>
    %103 = arith.addf %94, %102 : vector<13x64xf32>
    %c2_i32_83 = arith.constant 2 : i32
    %104 = arith.addi %57, %c2_i32_83 : i32
    %c0_84 = arith.constant 0 : index
    %105 = arith.index_cast %104 : i32 to index
    %c1_85 = arith.constant 1 : index
    %c0_86 = arith.constant 0 : index
    %106 = vector.load %arg2[%c0_84, %105, %c1_85, %c0_86] : memref<1x28x14x2xf32, #tpu.memory_space<vmem>>, vector<1x1x13x2xf32>
    %107 = vector.shape_cast %106 : vector<1x1x13x2xf32> to vector<13x2xf32>
    %108 = arith.truncf %107 : vector<13x2xf32> to vector<13x2xbf16>
    %c5_87 = arith.constant 5 : index
    %c0_88 = arith.constant 0 : index
    %c0_89 = arith.constant 0 : index
    %109 = vector.load %arg3[%c5_87, %c0_88, %c0_89] : memref<6x2x64xbf16, #tpu.memory_space<vmem>>, vector<1x2x64xbf16>
    %110 = vector.shape_cast %109 : vector<1x2x64xbf16> to vector<2x64xbf16>
    %cst_90 = arith.constant dense<0.000000e+00> : vector<13x64xf32>
    %111 = tpu.matmul %108, %110, %cst_90 {dimension_numbers = #tpu.dot_dimension_numbers<[1], [0], [0], [1], [0, 0, 1, 1], [], []>} : vector<13x2xbf16>, vector<2x64xbf16>, vector<13x64xf32> -> vector<13x64xf32>
    %112 = arith.addf %103, %111 : vector<13x64xf32>
    %113 = arith.maximumf %55, %112 : vector<13x64xf32>
    %c0_91 = arith.constant 0 : index
    %c0_92 = arith.constant 0 : index
    %114 = vector.load %arg4[%c0_91, %c0_92] : memref<1x64xf32, #tpu.memory_space<vmem>>, vector<1x64xf32>
    %115 = vector.broadcast %114 : vector<1x64xf32> to vector<13x64xf32>
    %116 = arith.addf %113, %115 : vector<13x64xf32>
    %cst_93 = arith.constant 0.000000e+00 : f32
    %117 = vector.broadcast %cst_93 : f32 to vector<13x64xf32>
    %118 = arith.maximumf %116, %117 : vector<13x64xf32>
    %119 = vector.extract_strided_slice %118 {offsets = [0, 0], sizes = [13, 32], strides = [1, 1]} : vector<13x64xf32> to vector<13x32xf32>
    %120 = vector.extract_strided_slice %118 {offsets = [0, 32], sizes = [13, 32], strides = [1, 1]} : vector<13x64xf32> to vector<13x32xf32>
    %121 = arith.maximumf %119, %120 : vector<13x32xf32>
    %c0_94 = arith.constant 0 : index
    %c0_95 = arith.constant 0 : index
    %c0_96 = arith.constant 0 : index
    %c0_97 = arith.constant 0 : index
    %122 = vector.load %arg5[%c0_94, %c0_95, %c0_96, %c0_97] : memref<1x1x13x32xf32, #tpu.memory_space<vmem>>, vector<1x1x13x32xf32>
    %123 = vector.shape_cast %122 : vector<1x1x13x32xf32> to vector<13x32xf32>
    %124 = vector.shape_cast %121 : vector<13x32xf32> to vector<1x1x13x32xf32>
    tpu.vector_store %arg5[%c0_94, %c0_95, %c0_96, %c0_97], %124 {strides = array<i32>} : memref<1x1x13x32xf32, #tpu.memory_space<vmem>>, vector<1x1x13x32xf32>,
    return
  }
  func.func @transform_0(%arg0: i32, %arg1: i32) -> (i32, i32, i32, i32) {
    %c0_i32 = arith.constant 0 : i32
    %c0_i32_0 = arith.constant 0 : i32
    %c0_i32_1 = arith.constant 0 : i32
    %c0_i32_2 = arith.constant 0 : i32
    return %arg0, %c0_i32, %c0_i32_0, %c0_i32_1 : i32, i32, i32, i32
  }
  func.func @transform_1(%arg0: i32, %arg1: i32) -> (i32, i32, i32) {
    %c0_i32 = arith.constant 0 : i32
    %c0_i32_0 = arith.constant 0 : i32
    %c0_i32_1 = arith.constant 0 : i32
    %c0_i32_2 = arith.constant 0 : i32
    return %c0_i32, %c0_i32_0, %c0_i32_1 : i32, i32, i32
  }
  func.func @transform_2(%arg0: i32, %arg1: i32) -> (i32, i32) {
    %c0_i32 = arith.constant 0 : i32
    %c0_i32_0 = arith.constant 0 : i32
    %c0_i32_1 = arith.constant 0 : i32
    return %c0_i32, %c0_i32_0 : i32, i32
  }
  func.func @transform_3(%arg0: i32, %arg1: i32) -> (i32, i32, i32, i32) {
    %c0_i32 = arith.constant 0 : i32
    %c0_i32_0 = arith.constant 0 : i32
    %c0_i32_1 = arith.constant 0 : i32
    return %arg0, %arg1, %c0_i32, %c0_i32_0 : i32, i32, i32, i32
  }
}

module attributes {stable_mosaic.version = 11 : i64} {
  func.func @_conv_relu_pool_kernel(%arg0: i32, %arg1: i32, %arg2: memref<1x13x7x64xf32, #tpu.memory_space<vmem>>, %arg3: memref<6x64x128xbf16, #tpu.memory_space<vmem>>, %arg4: memref<1x128xf32, #tpu.memory_space<vmem>>, %arg5: memref<1x1x5x64xf32, #tpu.memory_space<vmem>>) attributes {dimension_semantics = [#tpu.dimension_semantics<parallel>, #tpu.dimension_semantics<parallel>], iteration_bounds = array<i64: 2, 5>, scalar_prefetch = 0 : i64, scratch_operands = 0 : i64, tpu.core_type = #tpu.core_type<tc>, window_params = [{transform_indices = @transform_0, window_bounds = array<i64: 1, 13, 7, 64>}, {pipeline_mode = #tpu.pipeline_mode<synchronous>, transform_indices = @transform_1, window_bounds = array<i64: 6, 64, 128>}, {pipeline_mode = #tpu.pipeline_mode<synchronous>, transform_indices = @transform_2, window_bounds = array<i64: 1, 128>}, {transform_indices = @transform_3, window_bounds = array<i64: 1, 1, 5, 64>}]} {
    %c2_i32 = arith.constant 2 : i32
    %0 = arith.muli %c2_i32, %arg1 : i32
    %cst = arith.constant 0.000000e+00 : f32
    %1 = vector.broadcast %cst : f32 to vector<5x128xf32>
    %c0_i32 = arith.constant 0 : i32
    %2 = arith.addi %0, %c0_i32 : i32
    %c0 = arith.constant 0 : index
    %3 = arith.index_cast %2 : i32 to index
    %c0_0 = arith.constant 0 : index
    %c0_1 = arith.constant 0 : index
    %4 = vector.load %arg2[%c0, %3, %c0_0, %c0_1] : memref<1x13x7x64xf32, #tpu.memory_space<vmem>>, vector<1x1x5x64xf32>
    %5 = vector.shape_cast %4 : vector<1x1x5x64xf32> to vector<5x64xf32>
    %6 = arith.truncf %5 : vector<5x64xf32> to vector<5x64xbf16>
    %c0_2 = arith.constant 0 : index
    %c0_3 = arith.constant 0 : index
    %c0_4 = arith.constant 0 : index
    %7 = vector.load %arg3[%c0_2, %c0_3, %c0_4] : memref<6x64x128xbf16, #tpu.memory_space<vmem>>, vector<1x64x128xbf16>
    %8 = vector.shape_cast %7 : vector<1x64x128xbf16> to vector<64x128xbf16>
    %cst_5 = arith.constant dense<0.000000e+00> : vector<5x128xf32>
    %9 = tpu.matmul %6, %8, %cst_5 {dimension_numbers = #tpu.dot_dimension_numbers<[1], [0], [0], [1], [0, 0, 1, 1], [], []>} : vector<5x64xbf16>, vector<64x128xbf16>, vector<5x128xf32> -> vector<5x128xf32>
    %10 = arith.addf %1, %9 : vector<5x128xf32>
    %c0_i32_6 = arith.constant 0 : i32
    %11 = arith.addi %0, %c0_i32_6 : i32
    %c0_7 = arith.constant 0 : index
    %12 = arith.index_cast %11 : i32 to index
    %c1 = arith.constant 1 : index
    %c0_8 = arith.constant 0 : index
    %13 = vector.load %arg2[%c0_7, %12, %c1, %c0_8] : memref<1x13x7x64xf32, #tpu.memory_space<vmem>>, vector<1x1x5x64xf32>
    %14 = vector.shape_cast %13 : vector<1x1x5x64xf32> to vector<5x64xf32>
    %15 = arith.truncf %14 : vector<5x64xf32> to vector<5x64xbf16>
    %c1_9 = arith.constant 1 : index
    %c0_10 = arith.constant 0 : index
    %c0_11 = arith.constant 0 : index
    %16 = vector.load %arg3[%c1_9, %c0_10, %c0_11] : memref<6x64x128xbf16, #tpu.memory_space<vmem>>, vector<1x64x128xbf16>
    %17 = vector.shape_cast %16 : vector<1x64x128xbf16> to vector<64x128xbf16>
    %cst_12 = arith.constant dense<0.000000e+00> : vector<5x128xf32>
    %18 = tpu.matmul %15, %17, %cst_12 {dimension_numbers = #tpu.dot_dimension_numbers<[1], [0], [0], [1], [0, 0, 1, 1], [], []>} : vector<5x64xbf16>, vector<64x128xbf16>, vector<5x128xf32> -> vector<5x128xf32>
    %19 = arith.addf %10, %18 : vector<5x128xf32>
    %c1_i32 = arith.constant 1 : i32
    %20 = arith.addi %0, %c1_i32 : i32
    %c0_13 = arith.constant 0 : index
    %21 = arith.index_cast %20 : i32 to index
    %c0_14 = arith.constant 0 : index
    %c0_15 = arith.constant 0 : index
    %22 = vector.load %arg2[%c0_13, %21, %c0_14, %c0_15] : memref<1x13x7x64xf32, #tpu.memory_space<vmem>>, vector<1x1x5x64xf32>
    %23 = vector.shape_cast %22 : vector<1x1x5x64xf32> to vector<5x64xf32>
    %24 = arith.truncf %23 : vector<5x64xf32> to vector<5x64xbf16>
    %c2 = arith.constant 2 : index
    %c0_16 = arith.constant 0 : index
    %c0_17 = arith.constant 0 : index
    %25 = vector.load %arg3[%c2, %c0_16, %c0_17] : memref<6x64x128xbf16, #tpu.memory_space<vmem>>, vector<1x64x128xbf16>
    %26 = vector.shape_cast %25 : vector<1x64x128xbf16> to vector<64x128xbf16>
    %cst_18 = arith.constant dense<0.000000e+00> : vector<5x128xf32>
    %27 = tpu.matmul %24, %26, %cst_18 {dimension_numbers = #tpu.dot_dimension_numbers<[1], [0], [0], [1], [0, 0, 1, 1], [], []>} : vector<5x64xbf16>, vector<64x128xbf16>, vector<5x128xf32> -> vector<5x128xf32>
    %28 = arith.addf %19, %27 : vector<5x128xf32>
    %c1_i32_19 = arith.constant 1 : i32
    %29 = arith.addi %0, %c1_i32_19 : i32
    %c0_20 = arith.constant 0 : index
    %30 = arith.index_cast %29 : i32 to index
    %c1_21 = arith.constant 1 : index
    %c0_22 = arith.constant 0 : index
    %31 = vector.load %arg2[%c0_20, %30, %c1_21, %c0_22] : memref<1x13x7x64xf32, #tpu.memory_space<vmem>>, vector<1x1x5x64xf32>
    %32 = vector.shape_cast %31 : vector<1x1x5x64xf32> to vector<5x64xf32>
    %33 = arith.truncf %32 : vector<5x64xf32> to vector<5x64xbf16>
    %c3 = arith.constant 3 : index
    %c0_23 = arith.constant 0 : index
    %c0_24 = arith.constant 0 : index
    %34 = vector.load %arg3[%c3, %c0_23, %c0_24] : memref<6x64x128xbf16, #tpu.memory_space<vmem>>, vector<1x64x128xbf16>
    %35 = vector.shape_cast %34 : vector<1x64x128xbf16> to vector<64x128xbf16>
    %cst_25 = arith.constant dense<0.000000e+00> : vector<5x128xf32>
    %36 = tpu.matmul %33, %35, %cst_25 {dimension_numbers = #tpu.dot_dimension_numbers<[1], [0], [0], [1], [0, 0, 1, 1], [], []>} : vector<5x64xbf16>, vector<64x128xbf16>, vector<5x128xf32> -> vector<5x128xf32>
    %37 = arith.addf %28, %36 : vector<5x128xf32>
    %c2_i32_26 = arith.constant 2 : i32
    %38 = arith.addi %0, %c2_i32_26 : i32
    %c0_27 = arith.constant 0 : index
    %39 = arith.index_cast %38 : i32 to index
    %c0_28 = arith.constant 0 : index
    %c0_29 = arith.constant 0 : index
    %40 = vector.load %arg2[%c0_27, %39, %c0_28, %c0_29] : memref<1x13x7x64xf32, #tpu.memory_space<vmem>>, vector<1x1x5x64xf32>
    %41 = vector.shape_cast %40 : vector<1x1x5x64xf32> to vector<5x64xf32>
    %42 = arith.truncf %41 : vector<5x64xf32> to vector<5x64xbf16>
    %c4 = arith.constant 4 : index
    %c0_30 = arith.constant 0 : index
    %c0_31 = arith.constant 0 : index
    %43 = vector.load %arg3[%c4, %c0_30, %c0_31] : memref<6x64x128xbf16, #tpu.memory_space<vmem>>, vector<1x64x128xbf16>
    %44 = vector.shape_cast %43 : vector<1x64x128xbf16> to vector<64x128xbf16>
    %cst_32 = arith.constant dense<0.000000e+00> : vector<5x128xf32>
    %45 = tpu.matmul %42, %44, %cst_32 {dimension_numbers = #tpu.dot_dimension_numbers<[1], [0], [0], [1], [0, 0, 1, 1], [], []>} : vector<5x64xbf16>, vector<64x128xbf16>, vector<5x128xf32> -> vector<5x128xf32>
    %46 = arith.addf %37, %45 : vector<5x128xf32>
    %c2_i32_33 = arith.constant 2 : i32
    %47 = arith.addi %0, %c2_i32_33 : i32
    %c0_34 = arith.constant 0 : index
    %48 = arith.index_cast %47 : i32 to index
    %c1_35 = arith.constant 1 : index
    %c0_36 = arith.constant 0 : index
    %49 = vector.load %arg2[%c0_34, %48, %c1_35, %c0_36] : memref<1x13x7x64xf32, #tpu.memory_space<vmem>>, vector<1x1x5x64xf32>
    %50 = vector.shape_cast %49 : vector<1x1x5x64xf32> to vector<5x64xf32>
    %51 = arith.truncf %50 : vector<5x64xf32> to vector<5x64xbf16>
    %c5 = arith.constant 5 : index
    %c0_37 = arith.constant 0 : index
    %c0_38 = arith.constant 0 : index
    %52 = vector.load %arg3[%c5, %c0_37, %c0_38] : memref<6x64x128xbf16, #tpu.memory_space<vmem>>, vector<1x64x128xbf16>
    %53 = vector.shape_cast %52 : vector<1x64x128xbf16> to vector<64x128xbf16>
    %cst_39 = arith.constant dense<0.000000e+00> : vector<5x128xf32>
    %54 = tpu.matmul %51, %53, %cst_39 {dimension_numbers = #tpu.dot_dimension_numbers<[1], [0], [0], [1], [0, 0, 1, 1], [], []>} : vector<5x64xbf16>, vector<64x128xbf16>, vector<5x128xf32> -> vector<5x128xf32>
    %55 = arith.addf %46, %54 : vector<5x128xf32>
    %c2_i32_40 = arith.constant 2 : i32
    %56 = arith.muli %c2_i32_40, %arg1 : i32
    %c1_i32_41 = arith.constant 1 : i32
    %57 = arith.addi %56, %c1_i32_41 : i32
    %cst_42 = arith.constant 0.000000e+00 : f32
    %58 = vector.broadcast %cst_42 : f32 to vector<5x128xf32>
    %c0_i32_43 = arith.constant 0 : i32
    %59 = arith.addi %57, %c0_i32_43 : i32
    %c0_44 = arith.constant 0 : index
    %60 = arith.index_cast %59 : i32 to index
    %c0_45 = arith.constant 0 : index
    %c0_46 = arith.constant 0 : index
    %61 = vector.load %arg2[%c0_44, %60, %c0_45, %c0_46] : memref<1x13x7x64xf32, #tpu.memory_space<vmem>>, vector<1x1x5x64xf32>
    %62 = vector.shape_cast %61 : vector<1x1x5x64xf32> to vector<5x64xf32>
    %63 = arith.truncf %62 : vector<5x64xf32> to vector<5x64xbf16>
    %c0_47 = arith.constant 0 : index
    %c0_48 = arith.constant 0 : index
    %c0_49 = arith.constant 0 : index
    %64 = vector.load %arg3[%c0_47, %c0_48, %c0_49] : memref<6x64x128xbf16, #tpu.memory_space<vmem>>, vector<1x64x128xbf16>
    %65 = vector.shape_cast %64 : vector<1x64x128xbf16> to vector<64x128xbf16>
    %cst_50 = arith.constant dense<0.000000e+00> : vector<5x128xf32>
    %66 = tpu.matmul %63, %65, %cst_50 {dimension_numbers = #tpu.dot_dimension_numbers<[1], [0], [0], [1], [0, 0, 1, 1], [], []>} : vector<5x64xbf16>, vector<64x128xbf16>, vector<5x128xf32> -> vector<5x128xf32>
    %67 = arith.addf %58, %66 : vector<5x128xf32>
    %c0_i32_51 = arith.constant 0 : i32
    %68 = arith.addi %57, %c0_i32_51 : i32
    %c0_52 = arith.constant 0 : index
    %69 = arith.index_cast %68 : i32 to index
    %c1_53 = arith.constant 1 : index
    %c0_54 = arith.constant 0 : index
    %70 = vector.load %arg2[%c0_52, %69, %c1_53, %c0_54] : memref<1x13x7x64xf32, #tpu.memory_space<vmem>>, vector<1x1x5x64xf32>
    %71 = vector.shape_cast %70 : vector<1x1x5x64xf32> to vector<5x64xf32>
    %72 = arith.truncf %71 : vector<5x64xf32> to vector<5x64xbf16>
    %c1_55 = arith.constant 1 : index
    %c0_56 = arith.constant 0 : index
    %c0_57 = arith.constant 0 : index
    %73 = vector.load %arg3[%c1_55, %c0_56, %c0_57] : memref<6x64x128xbf16, #tpu.memory_space<vmem>>, vector<1x64x128xbf16>
    %74 = vector.shape_cast %73 : vector<1x64x128xbf16> to vector<64x128xbf16>
    %cst_58 = arith.constant dense<0.000000e+00> : vector<5x128xf32>
    %75 = tpu.matmul %72, %74, %cst_58 {dimension_numbers = #tpu.dot_dimension_numbers<[1], [0], [0], [1], [0, 0, 1, 1], [], []>} : vector<5x64xbf16>, vector<64x128xbf16>, vector<5x128xf32> -> vector<5x128xf32>
    %76 = arith.addf %67, %75 : vector<5x128xf32>
    %c1_i32_59 = arith.constant 1 : i32
    %77 = arith.addi %57, %c1_i32_59 : i32
    %c0_60 = arith.constant 0 : index
    %78 = arith.index_cast %77 : i32 to index
    %c0_61 = arith.constant 0 : index
    %c0_62 = arith.constant 0 : index
    %79 = vector.load %arg2[%c0_60, %78, %c0_61, %c0_62] : memref<1x13x7x64xf32, #tpu.memory_space<vmem>>, vector<1x1x5x64xf32>
    %80 = vector.shape_cast %79 : vector<1x1x5x64xf32> to vector<5x64xf32>
    %81 = arith.truncf %80 : vector<5x64xf32> to vector<5x64xbf16>
    %c2_63 = arith.constant 2 : index
    %c0_64 = arith.constant 0 : index
    %c0_65 = arith.constant 0 : index
    %82 = vector.load %arg3[%c2_63, %c0_64, %c0_65] : memref<6x64x128xbf16, #tpu.memory_space<vmem>>, vector<1x64x128xbf16>
    %83 = vector.shape_cast %82 : vector<1x64x128xbf16> to vector<64x128xbf16>
    %cst_66 = arith.constant dense<0.000000e+00> : vector<5x128xf32>
    %84 = tpu.matmul %81, %83, %cst_66 {dimension_numbers = #tpu.dot_dimension_numbers<[1], [0], [0], [1], [0, 0, 1, 1], [], []>} : vector<5x64xbf16>, vector<64x128xbf16>, vector<5x128xf32> -> vector<5x128xf32>
    %85 = arith.addf %76, %84 : vector<5x128xf32>
    %c1_i32_67 = arith.constant 1 : i32
    %86 = arith.addi %57, %c1_i32_67 : i32
    %c0_68 = arith.constant 0 : index
    %87 = arith.index_cast %86 : i32 to index
    %c1_69 = arith.constant 1 : index
    %c0_70 = arith.constant 0 : index
    %88 = vector.load %arg2[%c0_68, %87, %c1_69, %c0_70] : memref<1x13x7x64xf32, #tpu.memory_space<vmem>>, vector<1x1x5x64xf32>
    %89 = vector.shape_cast %88 : vector<1x1x5x64xf32> to vector<5x64xf32>
    %90 = arith.truncf %89 : vector<5x64xf32> to vector<5x64xbf16>
    %c3_71 = arith.constant 3 : index
    %c0_72 = arith.constant 0 : index
    %c0_73 = arith.constant 0 : index
    %91 = vector.load %arg3[%c3_71, %c0_72, %c0_73] : memref<6x64x128xbf16, #tpu.memory_space<vmem>>, vector<1x64x128xbf16>
    %92 = vector.shape_cast %91 : vector<1x64x128xbf16> to vector<64x128xbf16>
    %cst_74 = arith.constant dense<0.000000e+00> : vector<5x128xf32>
    %93 = tpu.matmul %90, %92, %cst_74 {dimension_numbers = #tpu.dot_dimension_numbers<[1], [0], [0], [1], [0, 0, 1, 1], [], []>} : vector<5x64xbf16>, vector<64x128xbf16>, vector<5x128xf32> -> vector<5x128xf32>
    %94 = arith.addf %85, %93 : vector<5x128xf32>
    %c2_i32_75 = arith.constant 2 : i32
    %95 = arith.addi %57, %c2_i32_75 : i32
    %c0_76 = arith.constant 0 : index
    %96 = arith.index_cast %95 : i32 to index
    %c0_77 = arith.constant 0 : index
    %c0_78 = arith.constant 0 : index
    %97 = vector.load %arg2[%c0_76, %96, %c0_77, %c0_78] : memref<1x13x7x64xf32, #tpu.memory_space<vmem>>, vector<1x1x5x64xf32>
    %98 = vector.shape_cast %97 : vector<1x1x5x64xf32> to vector<5x64xf32>
    %99 = arith.truncf %98 : vector<5x64xf32> to vector<5x64xbf16>
    %c4_79 = arith.constant 4 : index
    %c0_80 = arith.constant 0 : index
    %c0_81 = arith.constant 0 : index
    %100 = vector.load %arg3[%c4_79, %c0_80, %c0_81] : memref<6x64x128xbf16, #tpu.memory_space<vmem>>, vector<1x64x128xbf16>
    %101 = vector.shape_cast %100 : vector<1x64x128xbf16> to vector<64x128xbf16>
    %cst_82 = arith.constant dense<0.000000e+00> : vector<5x128xf32>
    %102 = tpu.matmul %99, %101, %cst_82 {dimension_numbers = #tpu.dot_dimension_numbers<[1], [0], [0], [1], [0, 0, 1, 1], [], []>} : vector<5x64xbf16>, vector<64x128xbf16>, vector<5x128xf32> -> vector<5x128xf32>
    %103 = arith.addf %94, %102 : vector<5x128xf32>
    %c2_i32_83 = arith.constant 2 : i32
    %104 = arith.addi %57, %c2_i32_83 : i32
    %c0_84 = arith.constant 0 : index
    %105 = arith.index_cast %104 : i32 to index
    %c1_85 = arith.constant 1 : index
    %c0_86 = arith.constant 0 : index
    %106 = vector.load %arg2[%c0_84, %105, %c1_85, %c0_86] : memref<1x13x7x64xf32, #tpu.memory_space<vmem>>, vector<1x1x5x64xf32>
    %107 = vector.shape_cast %106 : vector<1x1x5x64xf32> to vector<5x64xf32>
    %108 = arith.truncf %107 : vector<5x64xf32> to vector<5x64xbf16>
    %c5_87 = arith.constant 5 : index
    %c0_88 = arith.constant 0 : index
    %c0_89 = arith.constant 0 : index
    %109 = vector.load %arg3[%c5_87, %c0_88, %c0_89] : memref<6x64x128xbf16, #tpu.memory_space<vmem>>, vector<1x64x128xbf16>
    %110 = vector.shape_cast %109 : vector<1x64x128xbf16> to vector<64x128xbf16>
    %cst_90 = arith.constant dense<0.000000e+00> : vector<5x128xf32>
    %111 = tpu.matmul %108, %110, %cst_90 {dimension_numbers = #tpu.dot_dimension_numbers<[1], [0], [0], [1], [0, 0, 1, 1], [], []>} : vector<5x64xbf16>, vector<64x128xbf16>, vector<5x128xf32> -> vector<5x128xf32>
    %112 = arith.addf %103, %111 : vector<5x128xf32>
    %113 = arith.maximumf %55, %112 : vector<5x128xf32>
    %c0_91 = arith.constant 0 : index
    %c0_92 = arith.constant 0 : index
    %114 = vector.load %arg4[%c0_91, %c0_92] : memref<1x128xf32, #tpu.memory_space<vmem>>, vector<1x128xf32>
    %115 = vector.broadcast %114 : vector<1x128xf32> to vector<5x128xf32>
    %116 = arith.addf %113, %115 : vector<5x128xf32>
    %cst_93 = arith.constant 0.000000e+00 : f32
    %117 = vector.broadcast %cst_93 : f32 to vector<5x128xf32>
    %118 = arith.maximumf %116, %117 : vector<5x128xf32>
    %119 = vector.extract_strided_slice %118 {offsets = [0, 0], sizes = [5, 64], strides = [1, 1]} : vector<5x128xf32> to vector<5x64xf32>
    %120 = vector.extract_strided_slice %118 {offsets = [0, 64], sizes = [5, 64], strides = [1, 1]} : vector<5x128xf32> to vector<5x64xf32>
    %121 = arith.maximumf %119, %120 : vector<5x64xf32>
    %c0_94 = arith.constant 0 : index
    %c0_95 = arith.constant 0 : index
    %c0_96 = arith.constant 0 : index
    %c0_97 = arith.constant 0 : index
    %122 = vector.load %arg5[%c0_94, %c0_95, %c0_96, %c0_97] : memref<1x1x5x64xf32, #tpu.memory_space<vmem>>, vector<1x1x5x64xf32>
    %123 = vector.shape_cast %122 : vector<1x1x5x64xf32> to vector<5x64xf32>
    %124 = vector.shape_cast %121 : vector<5x64xf32> to vector<1x1x5x64xf32>
    tpu.vector_store %arg5[%c0_94, %c0_95, %c0_96, %c0_97], %124 {strides = array<i32>} : memref<1x1x5x64xf32, #tpu.memory_space<vmem>>, vector<1x1x5x64xf32>,
    return
  }
  func.func @transform_0(%arg0: i32, %arg1: i32) -> (i32, i32, i32, i32) {
    %c0_i32 = arith.constant 0 : i32
    %c0_i32_0 = arith.constant 0 : i32
    %c0_i32_1 = arith.constant 0 : i32
    %c0_i32_2 = arith.constant 0 : i32
    return %arg0, %c0_i32, %c0_i32_0, %c0_i32_1 : i32, i32, i32, i32
  }
  func.func @transform_1(%arg0: i32, %arg1: i32) -> (i32, i32, i32) {
    %c0_i32 = arith.constant 0 : i32
    %c0_i32_0 = arith.constant 0 : i32
    %c0_i32_1 = arith.constant 0 : i32
    %c0_i32_2 = arith.constant 0 : i32
    return %c0_i32, %c0_i32_0, %c0_i32_1 : i32, i32, i32
  }
  func.func @transform_2(%arg0: i32, %arg1: i32) -> (i32, i32) {
    %c0_i32 = arith.constant 0 : i32
    %c0_i32_0 = arith.constant 0 : i32
    %c0_i32_1 = arith.constant 0 : i32
    return %c0_i32, %c0_i32_0 : i32, i32
  }
  func.func @transform_3(%arg0: i32, %arg1: i32) -> (i32, i32, i32, i32) {
    %c0_i32 = arith.constant 0 : i32
    %c0_i32_0 = arith.constant 0 : i32
    %c0_i32_1 = arith.constant 0 : i32
    return %arg0, %arg1, %c0_i32, %c0_i32_0 : i32, i32, i32, i32
  }
}

module attributes {stable_mosaic.version = 11 : i64} {
  func.func @_fc_fused_kernel(%arg0: i32, %arg1: memref<8x1600xf32, #tpu.memory_space<vmem>>, %arg2: memref<1600x128xbf16, #tpu.memory_space<vmem>>, %arg3: memref<1x128xf32, #tpu.memory_space<vmem>>, %arg4: memref<128x128xbf16, #tpu.memory_space<vmem>>, %arg5: memref<1x128xf32, #tpu.memory_space<vmem>>, %arg6: memref<8x128xf32, #tpu.memory_space<vmem>>) attributes {dimension_semantics = [#tpu.dimension_semantics<parallel>], iteration_bounds = array<i64: 1>, scalar_prefetch = 0 : i64, scratch_operands = 0 : i64, tpu.core_type = #tpu.core_type<tc>, window_params = [{transform_indices = @transform_0, window_bounds = array<i64: 8, 1600>}, {pipeline_mode = #tpu.pipeline_mode<synchronous>, transform_indices = @transform_1, window_bounds = array<i64: 1600, 128>}, {pipeline_mode = #tpu.pipeline_mode<synchronous>, transform_indices = @transform_2, window_bounds = array<i64: 1, 128>}, {pipeline_mode = #tpu.pipeline_mode<synchronous>, transform_indices = @transform_3, window_bounds = array<i64: 128, 128>}, {pipeline_mode = #tpu.pipeline_mode<synchronous>, transform_indices = @transform_4, window_bounds = array<i64: 1, 128>}, {transform_indices = @transform_5, window_bounds = array<i64: 8, 128>}]} {
    %c0 = arith.constant 0 : index
    %c0_0 = arith.constant 0 : index
    %0 = vector.load %arg1[%c0, %c0_0] : memref<8x1600xf32, #tpu.memory_space<vmem>>, vector<8x1600xf32>
    %1 = arith.truncf %0 : vector<8x1600xf32> to vector<8x1600xbf16>
    %c0_1 = arith.constant 0 : index
    %c0_2 = arith.constant 0 : index
    %2 = vector.load %arg2[%c0_1, %c0_2] : memref<1600x128xbf16, #tpu.memory_space<vmem>>, vector<1600x128xbf16>
    %cst = arith.constant dense<0.000000e+00> : vector<8x128xf32>
    %3 = tpu.matmul %1, %2, %cst {dimension_numbers = #tpu.dot_dimension_numbers<[1], [0], [0], [1], [0, 0, 1, 1], [], []>} : vector<8x1600xbf16>, vector<1600x128xbf16>, vector<8x128xf32> -> vector<8x128xf32>
    %c0_3 = arith.constant 0 : index
    %c0_4 = arith.constant 0 : index
    %4 = vector.load %arg3[%c0_3, %c0_4] : memref<1x128xf32, #tpu.memory_space<vmem>>, vector<1x128xf32>
    %5 = vector.broadcast %4 : vector<1x128xf32> to vector<8x128xf32>
    %6 = arith.addf %3, %5 : vector<8x128xf32>
    %cst_5 = arith.constant 0.000000e+00 : f32
    %7 = vector.broadcast %cst_5 : f32 to vector<8x128xf32>
    %8 = arith.maximumf %6, %7 : vector<8x128xf32>
    %9 = arith.truncf %8 : vector<8x128xf32> to vector<8x128xbf16>
    %c0_6 = arith.constant 0 : index
    %c0_7 = arith.constant 0 : index
    %10 = vector.load %arg4[%c0_6, %c0_7] : memref<128x128xbf16, #tpu.memory_space<vmem>>, vector<128x128xbf16>
    %cst_8 = arith.constant dense<0.000000e+00> : vector<8x128xf32>
    %11 = tpu.matmul %9, %10, %cst_8 {dimension_numbers = #tpu.dot_dimension_numbers<[1], [0], [0], [1], [0, 0, 1, 1], [], []>} : vector<8x128xbf16>, vector<128x128xbf16>, vector<8x128xf32> -> vector<8x128xf32>
    %c0_9 = arith.constant 0 : index
    %c0_10 = arith.constant 0 : index
    %12 = vector.load %arg5[%c0_9, %c0_10] : memref<1x128xf32, #tpu.memory_space<vmem>>, vector<1x128xf32>
    %13 = vector.broadcast %12 : vector<1x128xf32> to vector<8x128xf32>
    %14 = arith.addf %11, %13 : vector<8x128xf32>
    %c0_11 = arith.constant 0 : index
    %c0_12 = arith.constant 0 : index
    %15 = vector.load %arg6[%c0_11, %c0_12] : memref<8x128xf32, #tpu.memory_space<vmem>>, vector<8x128xf32>
    tpu.vector_store %arg6[%c0_11, %c0_12], %14 {strides = array<i32>} : memref<8x128xf32, #tpu.memory_space<vmem>>, vector<8x128xf32>,
    return
  }
  func.func @transform_0(%arg0: i32) -> (i32, i32) {
    %c0_i32 = arith.constant 0 : i32
    %c0_i32_0 = arith.constant 0 : i32
    return %arg0, %c0_i32 : i32, i32
  }
  func.func @transform_1(%arg0: i32) -> (i32, i32) {
    %c0_i32 = arith.constant 0 : i32
    %c0_i32_0 = arith.constant 0 : i32
    %c0_i32_1 = arith.constant 0 : i32
    return %c0_i32, %c0_i32_0 : i32, i32
  }
  func.func @transform_2(%arg0: i32) -> (i32, i32) {
    %c0_i32 = arith.constant 0 : i32
    %c0_i32_0 = arith.constant 0 : i32
    %c0_i32_1 = arith.constant 0 : i32
    return %c0_i32, %c0_i32_0 : i32, i32
  }
  func.func @transform_3(%arg0: i32) -> (i32, i32) {
    %c0_i32 = arith.constant 0 : i32
    %c0_i32_0 = arith.constant 0 : i32
    %c0_i32_1 = arith.constant 0 : i32
    return %c0_i32, %c0_i32_0 : i32, i32
  }
  func.func @transform_4(%arg0: i32) -> (i32, i32) {
    %c0_i32 = arith.constant 0 : i32
    %c0_i32_0 = arith.constant 0 : i32
    %c0_i32_1 = arith.constant 0 : i32
    return %c0_i32, %c0_i32_0 : i32, i32
  }
  func.func @transform_5(%arg0: i32) -> (i32, i32) {
    %c0_i32 = arith.constant 0 : i32
    %c0_i32_0 = arith.constant 0 : i32
    return %arg0, %c0_i32 : i32, i32
  }
}

</mosaic_0001>

<llo_original>
// kernel: cnn_forward.3
$region0: #{cnn_forward.3}
  #allocation0 [shape = 'u32[]', space=smem, size = 0x4, offset = 0x4, fixed_abs, tag = 'smem constant byte address 0x4 - core index']
  #allocation1 [shape = 'u32[72,128]{1,0:T(1,128)}', space=vmem, size = 0x9000, scoped, tag = 'internal scratch']
  %s0 = inlined_call_operand.vmem [shape: f32[2,28,14,2], index: 0, kind: input, shape index: {}]
  %s1 = inlined_call_operand.vmem [shape: bf16[6,2,64], index: 1, kind: input, shape index: {}]
  %s2 = inlined_call_operand.vmem [shape: f32[1,64], index: 2, kind: input, shape index: {}]
  %s3 = inlined_call_operand.vmem [shape: f32[2,13,13,32], index: 3, kind: output, shape index: {}]
  %s4 = sld [smem:[#allocation0]]
  $region45: #{cnn_forward.3} parent=0
    _
  %s6 = ssub.s32 1, %s4
  %s7 = scalar_select 0, %s6, %s4
  loop: start=0, step=1, limit=28
  $region2: #{cnn_forward.3} parent=0 // loop_pre_header
    _
  $region3: #{cnn_forward.3} parent=0 // loop_header
    %s9 = sphi 0, %s13
    %p10 = scmp.ge.s32.totalorder %s9, 28
    %s16 = sphi 0, %s28
    %s17 = sphi 0, %s24
    %s18 = sphi 0, %s16
    %s19 = sphi 0, %s17
    %s20 = sphi 0, %s18
    %s21 = sphi 0, %s19
    %s31 = sphi 0, %s33
    %s34 = sphi 0, %s31
    %s35 = sphi 0, %s34
    %s51 = sphi 0, %s35
    %s55 = sphi 0, %s55
    %s57 = sphi 0, %s55
    %s58 = sphi 0, %s57
    %s72 = sphi 0, %s58
    %s76 = sphi 0, %s76
    %s78 = sphi 0, %s76
    %s79 = sphi 0, %s78
    %s93 = sphi 0, %s79
    %s101 = sphi 0, %s103
    %s104 = sphi 0, %s101
    %s105 = sphi 0, %s104
    %s121 = sphi 0, %s105
  $region4: #{cnn_forward.3} parent=0 // loop_header_branch
    %12 = sbr.rel (%p10) target = $region8
  $region5: #{cnn_forward.3} parent=0 // loop_body
    %s14 = ssub.s32 %s9, 1
    %s15 = ssub.s32 %s9, 2
    %s22 = sadd.s32 1, %s17
    %p23 = scmp.ge.s32.totalorder %s22, 13
    %s24 = scalar_select %p23, 0, %s22
    %s25 = sadd.s32 1, %s16
    %s26 = scalar_select %p23, %s25, %s16
    %p27 = scmp.ge.s32.totalorder %s26, 2
    %s28 = scalar_select %p27, 0, %s26
    %s29 = ssub.s32 %s16, %s28
    %p30 = scmp.eq.s32.totalorder %s29, 0
    %s32 = sadd.s32 %s31, 1
    %s33 = scalar_select %p30, %s31, %s32
    %p36 = pneg %p30
    %p37 = scmp.eq.s32.totalorder %s9, 25
    %p38 = por %p36, %p37
    %p39 = scmp.ne.s32.totalorder %s31, %s34
    %p40 = scmp.eq.s32.totalorder %s9, 0
    %p41 = por %p39, %p40
    %p42 = scmp.ne.s32.totalorder %s31, %s34
    %p43 = scmp.eq.s32.totalorder %s14, 25
    %p44 = por %p42, %p43
    %p45 = scmp.ne.s32.totalorder %s34, %s35
    %p46 = scmp.eq.s32.totalorder %s14, 0
    %p47 = por %p45, %p46
    %p48 = scmp.ne.s32.totalorder %s34, %s35
    %p49 = scmp.eq.s32.totalorder %s15, 25
    %p50 = por %p48, %p49
    %p52 = scmp.ne.s32.totalorder %s35, %s51
    %p53 = scmp.eq.s32.totalorder %s15, 0
    %p54 = por %p52, %p53
    %s56 = sadd.s32 %s55, 1
    %p59 = scmp.eq.s32.totalorder %s9, 25
    %p60 = scmp.ne.s32.totalorder %s55, %s57
    %p61 = scmp.eq.s32.totalorder %s9, 0
    %p62 = por %p60, %p61
    %p63 = scmp.ne.s32.totalorder %s55, %s57
    %p64 = scmp.eq.s32.totalorder %s14, 25
    %p65 = por %p63, %p64
    %p66 = scmp.ne.s32.totalorder %s57, %s58
    %p67 = scmp.eq.s32.totalorder %s14, 0
    %p68 = por %p66, %p67
    %p69 = scmp.ne.s32.totalorder %s57, %s58
    %p70 = scmp.eq.s32.totalorder %s15, 25
    %p71 = por %p69, %p70
    %p73 = scmp.ne.s32.totalorder %s58, %s72
    %p74 = scmp.eq.s32.totalorder %s15, 0
    %p75 = por %p73, %p74
    %s77 = sadd.s32 %s76, 1
    %p80 = scmp.eq.s32.totalorder %s9, 25
    %p81 = scmp.ne.s32.totalorder %s76, %s78
    %p82 = scmp.eq.s32.totalorder %s9, 0
    %p83 = por %p81, %p82
    %p84 = scmp.ne.s32.totalorder %s76, %s78
    %p85 = scmp.eq.s32.totalorder %s14, 25
    %p86 = por %p84, %p85
    %p87 = scmp.ne.s32.totalorder %s78, %s79
    %p88 = scmp.eq.s32.totalorder %s14, 0
    %p89 = por %p87, %p88
    %p90 = scmp.ne.s32.totalorder %s78, %s79
    %p91 = scmp.eq.s32.totalorder %s15, 25
    %p92 = por %p90, %p91
    %p94 = scmp.ne.s32.totalorder %s79, %s93
    %p95 = scmp.eq.s32.totalorder %s15, 0
    %p96 = por %p94, %p95
    %s97 = ssub.s32 %s16, %s28
    %s98 = ssub.s32 %s17, %s24
    %s99 = sor.u32 %s97, %s98
    %p100 = scmp.eq.s32.totalorder %s99, 0
    %s102 = sadd.s32 %s101, 1
    %s103 = scalar_select %p100, %s101, %s102
    %p106 = pneg %p100
    %p107 = scmp.eq.s32.totalorder %s9, 25
    %p108 = por %p106, %p107
    %p109 = scmp.ne.s32.totalorder %s101, %s104
    %p110 = scmp.eq.s32.totalorder %s9, 0
    %p111 = por %p109, %p110
    %p112 = scmp.ne.s32.totalorder %s101, %s104
    %p113 = scmp.eq.s32.totalorder %s14, 25
    %p114 = por %p112, %p113
    %p115 = scmp.ne.s32.totalorder %s104, %s105
    %p116 = scmp.eq.s32.totalorder %s14, 0
    %p117 = por %p115, %p116
    %p118 = scmp.ne.s32.totalorder %s104, %s105
    %p119 = scmp.eq.s32.totalorder %s15, 25
    %p120 = por %p118, %p119
    %p122 = scmp.ne.s32.totalorder %s105, %s121
    %p123 = scmp.eq.s32.totalorder %s15, 0
    %p124 = por %p122, %p123
    %p125 = scmp.le.s32.totalorder 1, %s9
    %p126 = scmp.lt.s32.totalorder %s9, 27
    %p127 = pnand %p125, %p126
    %p128 = pneg %p127
    // Predicated region
    $region9: #{cnn_forward.3} parent=5 // pred_check
      _
    $region10: #{cnn_forward.3} parent=5 // pred_check_branch
      %130 = sbr.rel (%p127) target = $region12
    $region11: #{cnn_forward.3} parent=5 // pred_region
      %s131 = ssub.s32 %s9, 1
      // Predicated region
      $region13: #{cnn_forward.3} parent=11 // pred_check
        %p132 = pneg %p68
      $region14: #{cnn_forward.3} parent=11 // pred_check_branch
        %134 = sbr.rel (%p132) target = $region16
      $region15: #{cnn_forward.3} parent=11 // pred_region
        _
      $region16: #{cnn_forward.3} parent=11 // pred_fallthru
        _
      // Predicated region
      $region17: #{cnn_forward.3} parent=11 // pred_check
        %p135 = pneg %p89
      $region18: #{cnn_forward.3} parent=11 // pred_check_branch
        %137 = sbr.rel (%p135) target = $region20
      $region19: #{cnn_forward.3} parent=11 // pred_region
        _
      $region20: #{cnn_forward.3} parent=11 // pred_fallthru
        _
    $region12: #{cnn_forward.3} parent=5 // pred_fallthru
      _
    %p138 = scmp.lt.s32.totalorder %s9, 26
    // Predicated region
    $region21: #{cnn_forward.3} parent=5 // pred_check
      %p139 = pneg %p138
    $region22: #{cnn_forward.3} parent=5 // pred_check_branch
      %141 = sbr.rel (%p139) target = $region24
    $region23: #{cnn_forward.3} parent=5 // pred_region
      // Predicated region
      $region25: #{cnn_forward.3} parent=23 // pred_check
        %p142 = pneg %p41
      $region26: #{cnn_forward.3} parent=23 // pred_check_branch
        %144 = sbr.rel (%p142) target = $region28
      $region27: #{cnn_forward.3} parent=23 // pred_region
        %p145 = scmp.lt.s32.totalorder %s16, 1
        %s146 = scalar_select %p145, %s16, 1
        %s147 = smul.addr %s146, 56
        %s148 = smul.addr %s147, 8
        %s149 = scalar_lea.vmem %s0, %s148
      $region28: #{cnn_forward.3} parent=23 // pred_fallthru
        _
    $region24: #{cnn_forward.3} parent=5 // pred_fallthru
      _
    %p150 = scmp.le.s32.totalorder 1, %s9
    %p151 = scmp.lt.s32.totalorder %s9, 27
    %p152 = pnand %p150, %p151
    %p153 = pneg %p152
    // Predicated region
    $region29: #{cnn_forward.3} parent=5 // pred_check
      _
    $region30: #{cnn_forward.3} parent=5 // pred_check_branch
      %155 = sbr.rel (%p152) target = $region32
    $region31: #{cnn_forward.3} parent=5 // pred_region
      %s156 = ssub.s32 %s9, 1
      %p157 = scmp.lt.s32.totalorder %s18, 1
      %s158 = scalar_select %p157, %s18, 1
      %s159 = smul.addr %s158, 56
      %s160 = smul.addr %s159, 8
      %s161 = scalar_lea.vmem %s0, %s160
      %p162 = pneg %p47
      %p163 = pneg %p44
      %p164 = pneg %p68
      %p165 = pneg %p65
      %p166 = pneg %p89
      %p167 = pneg %p86
      %p168 = pneg %p117
      %p169 = pneg %p114
      %p170 = scmp.lt.s32.totalorder %s18, 1
      %s171 = scalar_select %p170, %s18, 1
      %p172 = scmp.lt.s32.totalorder %s19, 12
      %s173 = scalar_select %p172, %s19, 12
      %s174 = smul.addr %s173, 2
      %s175 = smul.addr %s171, 26
      %s176 = sadd.s32 %s174, %s175
      %s177 = smul.addr %s176, 8
      %s178 = scalar_lea.vmem %s3, %s177
      %p179 = scmp.lt.s32.totalorder %s18, 1
      %s180 = scalar_select %p179, %s18, 1
      %s181 = smul.addr %s180, 56
      %s182 = smul.addr %s181, 8
      %s183 = scalar_lea.vmem %s0, %s182
      %p184 = scmp.lt.s32.totalorder %s18, 1
      %s185 = scalar_select %p184, %s18, 1
      %p186 = scmp.lt.s32.totalorder %s19, 12
      %s187 = scalar_select %p186, %s19, 12
      %s188 = smul.addr %s187, 2
      %s189 = smul.addr %s185, 26
      %s190 = sadd.s32 %s188, %s189
      %s191 = smul.addr %s190, 8
      %s192 = scalar_lea.vmem %s3, %s191
      %s194 = smul.u32 %s19, 2
      %s195 = smul.u32 %s194, 16
      %s196 = scalar_lea.vmem %s183, %s195
      %v197 = vld [vmem:[%s196] sm:$0xff]
      %v198 = vld [vmem:[%s196 + $0x8] sm:$0x1f]
      %v199 = vpack.c.bf16 %v198, %v197
      %v200 = vld [vmem:[%s1] sm:$0x1]
      %v201 = vld [vmem:[%s196 + $0x1] sm:$0xff]
      %v202 = vld [vmem:[%s196 + $0x9] sm:$0x1f]
      %v203 = vpack.c.bf16 %v202, %v201
      %s204 = scalar_lea.vmem %s1, 1
      %v205 = vld [vmem:[%s204] sm:$0x1]
      %vm206 = vcmask 15360
      %v208 = vsel %vm206, %v203, 0
      %vm210 = vcmask 1040384
      %v212 = vsel %vm210, %v205, 0
      %214 = vmatpush.bf16.msra.mxu0 0
      %215 = vmatpush.bf16.msra.mxu0 0
      %216 = vmatpush.bf16.msra.mxu0 0
      %217 = vmatpush.bf16.msra.mxu0 0
      %218 = vmatpush.bf16.msra.mxu0 0
      %219 = vmatpush.bf16.msra.mxu0 0
      %220 = vmatpush.bf16.msra.mxu0 0
      %221 = vmatpush.bf16.msra.mxu0 %v212
      %222 = vmatmul.bf16.gmra.mxu0 %v208
      %v223 = vpop.f32.mrf.mxu0
      %v224 = vadd.f32 0.0, %v223
      %v225 = vpop.f32.mrf.mxu0
      %v226 = vadd.f32 0.0, %v225
      %227 = vdwg.mxu0
      %v229 = vsel %vm206, %v199, 0
      %v232 = vsel %vm210, %v200, 0
      %234 = vmatpush.bf16.msra.mxu0 0
      %235 = vmatpush.bf16.msra.mxu0 0
      %236 = vmatpush.bf16.msra.mxu0 0
      %237 = vmatpush.bf16.msra.mxu0 0
      %238 = vmatpush.bf16.msra.mxu0 0
      %239 = vmatpush.bf16.msra.mxu0 0
      %240 = vmatpush.bf16.msra.mxu0 0
      %241 = vmatpush.bf16.msra.mxu0 %v232
      %242 = vmatmul.bf16.gmra.mxu0 %v229
      %v243 = vpop.f32.mrf.mxu0
      %v244 = vadd.f32 %v224, %v243
      %v245 = vpop.f32.mrf.mxu0
      %v246 = vadd.f32 %v226, %v245
      %247 = vdwg.mxu0
      %s248 = sadd.s32 %s194, 1
      %s249 = smul.u32 %s248, 16
      %s250 = scalar_lea.vmem %s183, %s249
      %v251 = vld [vmem:[%s250] sm:$0xff]
      %v252 = vld [vmem:[%s250 + $0x8] sm:$0x1f]
      %v253 = vpack.c.bf16 %v252, %v251
      %s254 = scalar_lea.vmem %s1, 2
      %v255 = vld [vmem:[%s254] sm:$0x1]
      %v257 = vsel %vm206, %v253, 0
      %v260 = vsel %vm210, %v255, 0
      %262 = vmatpush.bf16.msra.mxu0 0
      %263 = vmatpush.bf16.msra.mxu0 0
      %264 = vmatpush.bf16.msra.mxu0 0
      %265 = vmatpush.bf16.msra.mxu0 0
      %266 = vmatpush.bf16.msra.mxu0 0
      %267 = vmatpush.bf16.msra.mxu0 0
      %268 = vmatpush.bf16.msra.mxu0 0
      %269 = vmatpush.bf16.msra.mxu0 %v260
      %270 = vmatmul.bf16.gmra.mxu0 %v257
      %v271 = vpop.f32.mrf.mxu0
      %v272 = vadd.f32 0.0, %v271
      %v273 = vpop.f32.mrf.mxu0
      %v274 = vadd.f32 0.0, %v273
      %275 = vdwg.mxu0
      %v276 = vadd.f32 %v244, %v272
      %v277 = vadd.f32 %v246, %v274
      %v278 = vld [vmem:[%s250 + $0x1] sm:$0xff]
      %v279 = vld [vmem:[%s250 + $0x9] sm:$0x1f]
      %v280 = vpack.c.bf16 %v279, %v278
      %s281 = scalar_lea.vmem %s1, 3
      %v282 = vld [vmem:[%s281] sm:$0x1]
      %v284 = vsel %vm206, %v280, 0
      %v287 = vsel %vm210, %v282, 0
      %289 = vmatpush.bf16.msra.mxu0 0
      %290 = vmatpush.bf16.msra.mxu0 0
      %291 = vmatpush.bf16.msra.mxu0 0
      %292 = vmatpush.bf16.msra.mxu0 0
      %293 = vmatpush.bf16.msra.mxu0 0
      %294 = vmatpush.bf16.msra.mxu0 0
      %295 = vmatpush.bf16.msra.mxu0 0
      %296 = vmatpush.bf16.msra.mxu0 %v287
      %297 = vmatmul.bf16.gmra.mxu0 %v284
      %v298 = vpop.f32.mrf.mxu0
      %v299 = vadd.f32 0.0, %v298
      %v300 = vpop.f32.mrf.mxu0
      %v301 = vadd.f32 0.0, %v300
      %302 = vdwg.mxu0
      %v303 = vadd.f32 %v276, %v299
      %v304 = vadd.f32 %v277, %v301
      %s305 = sadd.s32 %s194, 2
      %s306 = smul.u32 %s305, 16
      %s307 = scalar_lea.vmem %s183, %s306
      %v308 = vld [vmem:[%s307] sm:$0xff]
      %v309 = vld [vmem:[%s307 + $0x8] sm:$0x1f]
      %v310 = vpack.c.bf16 %v309, %v308
      %s311 = scalar_lea.vmem %s1, 4
      %v312 = vld [vmem:[%s311] sm:$0x1]
      %v314 = vsel %vm206, %v310, 0
      %v317 = vsel %vm210, %v312, 0
      %319 = vmatpush.bf16.msra.mxu0 0
      %320 = vmatpush.bf16.msra.mxu0 0
      %321 = vmatpush.bf16.msra.mxu0 0
      %322 = vmatpush.bf16.msra.mxu0 0
      %323 = vmatpush.bf16.msra.mxu0 0
      %324 = vmatpush.bf16.msra.mxu0 0
      %325 = vmatpush.bf16.msra.mxu0 0
      %326 = vmatpush.bf16.msra.mxu0 %v317
      %327 = vmatmul.bf16.gmra.mxu0 %v314
      %v328 = vpop.f32.mrf.mxu0
      %v329 = vadd.f32 0.0, %v328
      %v330 = vpop.f32.mrf.mxu0
      %v331 = vadd.f32 0.0, %v330
      %332 = vdwg.mxu0
      %v333 = vadd.f32 %v303, %v329
      %v334 = vadd.f32 %v304, %v331
      %v335 = vld [vmem:[%s307 + $0x1] sm:$0xff]
      %v336 = vld [vmem:[%s307 + $0x9] sm:$0x1f]
      %v337 = vpack.c.bf16 %v336, %v335
      %s338 = scalar_lea.vmem %s1, 5
      %v339 = vld [vmem:[%s338] sm:$0x1]
      %v341 = vsel %vm206, %v337, 0
      %v344 = vsel %vm210, %v339, 0
      %346 = vmatpush.bf16.msra.mxu0 0
      %347 = vmatpush.bf16.msra.mxu0 0
      %348 = vmatpush.bf16.msra.mxu0 0
      %349 = vmatpush.bf16.msra.mxu0 0
      %350 = vmatpush.bf16.msra.mxu0 0
      %351 = vmatpush.bf16.msra.mxu0 0
      %352 = vmatpush.bf16.msra.mxu0 0
      %353 = vmatpush.bf16.msra.mxu0 %v344
      %354 = vmatmul.bf16.gmra.mxu0 %v341
      %v355 = vpop.f32.mrf.mxu0
      %v356 = vadd.f32 0.0, %v355
      %v357 = vpop.f32.mrf.mxu0
      %v358 = vadd.f32 0.0, %v357
      %359 = vdwg.mxu0
      %v360 = vadd.f32 %v333, %v356
      %v361 = vadd.f32 %v334, %v358
      %362 = vmatpush.bf16.msra.mxu0 0
      %363 = vmatpush.bf16.msra.mxu0 0
      %364 = vmatpush.bf16.msra.mxu0 0
      %365 = vmatpush.bf16.msra.mxu0 0
      %366 = vmatpush.bf16.msra.mxu0 0
      %367 = vmatpush.bf16.msra.mxu0 0
      %368 = vmatpush.bf16.msra.mxu0 0
      %369 = vmatpush.bf16.msra.mxu0 %v212
      %370 = vmatmul.bf16.gmra.mxu0 %v284
      %v371 = vpop.f32.mrf.mxu0
      %v372 = vadd.f32 0.0, %v371
      %v373 = vpop.f32.mrf.mxu0
      %v374 = vadd.f32 0.0, %v373
      %375 = vdwg.mxu0
      %376 = vmatpush.bf16.msra.mxu0 0
      %377 = vmatpush.bf16.msra.mxu0 0
      %378 = vmatpush.bf16.msra.mxu0 0
      %379 = vmatpush.bf16.msra.mxu0 0
      %380 = vmatpush.bf16.msra.mxu0 0
      %381 = vmatpush.bf16.msra.mxu0 0
      %382 = vmatpush.bf16.msra.mxu0 0
      %383 = vmatpush.bf16.msra.mxu0 %v232
      %384 = vmatmul.bf16.gmra.mxu0 %v257
      %v385 = vpop.f32.mrf.mxu0
      %v386 = vadd.f32 %v372, %v385
      %v387 = vpop.f32.mrf.mxu0
      %v388 = vadd.f32 %v374, %v387
      %389 = vdwg.mxu0
      %390 = vmatpush.bf16.msra.mxu0 0
      %391 = vmatpush.bf16.msra.mxu0 0
      %392 = vmatpush.bf16.msra.mxu0 0
      %393 = vmatpush.bf16.msra.mxu0 0
      %394 = vmatpush.bf16.msra.mxu0 0
      %395 = vmatpush.bf16.msra.mxu0 0
      %396 = vmatpush.bf16.msra.mxu0 0
      %397 = vmatpush.bf16.msra.mxu0 %v260
      %398 = vmatmul.bf16.gmra.mxu0 %v314
      %v399 = vpop.f32.mrf.mxu0
      %v400 = vadd.f32 0.0, %v399
      %v401 = vpop.f32.mrf.mxu0
      %v402 = vadd.f32 0.0, %v401
      %403 = vdwg.mxu0
      %v404 = vadd.f32 %v386, %v400
      %v405 = vadd.f32 %v388, %v402
      %406 = vmatpush.bf16.msra.mxu0 0
      %407 = vmatpush.bf16.msra.mxu0 0
      %408 = vmatpush.bf16.msra.mxu0 0
      %409 = vmatpush.bf16.msra.mxu0 0
      %410 = vmatpush.bf16.msra.mxu0 0
      %411 = vmatpush.bf16.msra.mxu0 0
      %412 = vmatpush.bf16.msra.mxu0 0
      %413 = vmatpush.bf16.msra.mxu0 %v287
      %414 = vmatmul.bf16.gmra.mxu0 %v341
      %v415 = vpop.f32.mrf.mxu0
      %v416 = vadd.f32 0.0, %v415
      %v417 = vpop.f32.mrf.mxu0
      %v418 = vadd.f32 0.0, %v417
      %419 = vdwg.mxu0
      %v420 = vadd.f32 %v404, %v416
      %v421 = vadd.f32 %v405, %v418
      %s422 = sadd.s32 %s194, 3
      %s423 = smul.u32 %s422, 16
      %s424 = scalar_lea.vmem %s183, %s423
      %v425 = vld [vmem:[%s424] sm:$0xff]
      %v426 = vld [vmem:[%s424 + $0x8] sm:$0x1f]
      %v427 = vpack.c.bf16 %v426, %v425
      %v429 = vsel %vm206, %v427, 0
      %431 = vmatpush.bf16.msra.mxu0 0
      %432 = vmatpush.bf16.msra.mxu0 0
      %433 = vmatpush.bf16.msra.mxu0 0
      %434 = vmatpush.bf16.msra.mxu0 0
      %435 = vmatpush.bf16.msra.mxu0 0
      %436 = vmatpush.bf16.msra.mxu0 0
      %437 = vmatpush.bf16.msra.mxu0 0
      %438 = vmatpush.bf16.msra.mxu0 %v317
      %439 = vmatmul.bf16.gmra.mxu0 %v429
      %v440 = vpop.f32.mrf.mxu0
      %v441 = vadd.f32 0.0, %v440
      %v442 = vpop.f32.mrf.mxu0
      %v443 = vadd.f32 0.0, %v442
      %444 = vdwg.mxu0
      %v445 = vadd.f32 %v420, %v441
      %v446 = vadd.f32 %v421, %v443
      %v447 = vld [vmem:[%s424 + $0x1] sm:$0xff]
      %v448 = vld [vmem:[%s424 + $0x9] sm:$0x1f]
      %v449 = vpack.c.bf16 %v448, %v447
      %v451 = vsel %vm206, %v449, 0
      %453 = vmatpush.bf16.msra.mxu0 0
      %454 = vmatpush.bf16.msra.mxu0 0
      %455 = vmatpush.bf16.msra.mxu0 0
      %456 = vmatpush.bf16.msra.mxu0 0
      %457 = vmatpush.bf16.msra.mxu0 0
      %458 = vmatpush.bf16.msra.mxu0 0
      %459 = vmatpush.bf16.msra.mxu0 0
      %460 = vmatpush.bf16.msra.mxu0 %v344
      %461 = vmatmul.bf16.gmra.mxu0 %v451
      %v462 = vpop.f32.mrf.mxu0
      %v463 = vadd.f32 0.0, %v462
      %v464 = vpop.f32.mrf.mxu0
      %v465 = vadd.f32 0.0, %v464
      %466 = vdwg.mxu0
      %v467 = vadd.f32 %v445, %v463
      %v468 = vadd.f32 %v446, %v465
      %v469 = vmax.f32 %v360, %v467
      %v470 = vmax.f32 %v361, %v468
      %v471 = vld [vmem:[%s2] sm:$0x1]
      %v473 = vperm.slane %v471, 0
      %v475 = vadd.f32 %v469, %v473
      %v476 = vadd.f32 %v470, %v473
      %v477 = vmax.f32 %v475, 0.0
      %v478 = vmax.f32 %v476, 0.0
      %481 = vrot.lane.b32.xlu0 %v477, 96
      %v482 = vpop.permute.xlu0 %481
      %483 = vrot.lane.b32.xlu0 %v478, 96
      %v484 = vpop.permute.xlu0 %483
      %v487 = vmax.f32 %v477, %v482
      %v488 = vmax.f32 %v478, %v484
      %vm489 = vcmask 261120
      %490 = vst.msk [vmem:[%s192] sm:$0xff] %vm489, %v487
      %vm491 = vcmask 258048
      %492 = vst.msk [vmem:[%s192 + $0x8] sm:$0x1f] %vm491, %v488
      %p493 = scmp.lt.s32.totalorder %s18, 1
      %s494 = scalar_select %p493, %s18, 1
      %p495 = scmp.lt.s32.totalorder %s19, 12
      %s496 = scalar_select %p495, %s19, 12
      %s497 = smul.addr %s496, 2
      %s498 = smul.addr %s494, 26
      %s499 = sadd.s32 %s497, %s498
      %s500 = smul.addr %s499, 8
      %s501 = scalar_lea.vmem %s3, %s500
      // Predicated region
      $region33: #{cnn_forward.3} parent=31 // pred_check
        %p502 = pneg %p114
      $region34: #{cnn_forward.3} parent=31 // pred_check_branch
        %504 = sbr.rel (%p502) target = $region36
      $region35: #{cnn_forward.3} parent=31 // pred_region
        _
      $region36: #{cnn_forward.3} parent=31 // pred_fallthru
        _
    $region32: #{cnn_forward.3} parent=5 // pred_fallthru
      _
    %p505 = scmp.le.s32.totalorder 2, %s9
    // Predicated region
    $region37: #{cnn_forward.3} parent=5 // pred_check
      %p506 = pneg %p505
    $region38: #{cnn_forward.3} parent=5 // pred_check_branch
      %508 = sbr.rel (%p506) target = $region40
    $region39: #{cnn_forward.3} parent=5 // pred_region
      %s509 = ssub.s32 %s9, 2
      // Predicated region
      $region41: #{cnn_forward.3} parent=39 // pred_check
        %p510 = pneg %p120
      $region42: #{cnn_forward.3} parent=39 // pred_check_branch
        %512 = sbr.rel (%p510) target = $region44
      $region43: #{cnn_forward.3} parent=39 // pred_region
        %p513 = scmp.lt.s32.totalorder %s20, 1
        %s514 = scalar_select %p513, %s20, 1
        %p515 = scmp.lt.s32.totalorder %s21, 12
        %s516 = scalar_select %p515, %s21, 12
        %s517 = smul.addr %s516, 2
        %s518 = smul.addr %s514, 26
        %s519 = sadd.s32 %s517, %s518
        %s520 = smul.addr %s519, 8
        %s521 = scalar_lea.vmem %s3, %s520
      $region44: #{cnn_forward.3} parent=39 // pred_fallthru
        _
    $region40: #{cnn_forward.3} parent=5 // pred_fallthru
      _
  $region6: #{cnn_forward.3} parent=0 // loop_footer
    %s13 = sadd.s32 1, %s9
  $region7: #{cnn_forward.3} parent=0 // loop_footer_branch
    %8 = sbr.rel target = $region3
  $region8: #{cnn_forward.3} parent=0 // loop_exit
    _

// kernel: cnn_forward.4
$region0: #{cnn_forward.4}
  #allocation0 [shape = 'u32[]', space=smem, size = 0x4, offset = 0x4, fixed_abs, tag = 'smem constant byte address 0x4 - core index']
  #allocation1 [shape = 'u32[72,128]{1,0:T(1,128)}', space=vmem, size = 0x9000, scoped, tag = 'internal scratch']
  %s0 = inlined_call_operand.vmem [shape: f32[2,13,7,64], index: 0, kind: input, shape index: {}]
  %s1 = inlined_call_operand.vmem [shape: bf16[6,64,128], index: 1, kind: input, shape index: {}]
  %s2 = inlined_call_operand.vmem [shape: f32[1,128], index: 2, kind: input, shape index: {}]
  %s3 = inlined_call_operand.vmem [shape: f32[2,5,5,64], index: 3, kind: output, shape index: {}]
  %s4 = sld [smem:[#allocation0]]
  $region45: #{cnn_forward.4} parent=0
    _
  %s6 = ssub.s32 1, %s4
  %s7 = scalar_select 0, %s6, %s4
  loop: start=0, step=1, limit=12
  $region2: #{cnn_forward.4} parent=0 // loop_pre_header
    _
  $region3: #{cnn_forward.4} parent=0 // loop_header
    %s9 = sphi 0, %s13
    %p10 = scmp.ge.s32.totalorder %s9, 12
    %s16 = sphi 0, %s28
    %s17 = sphi 0, %s24
    %s18 = sphi 0, %s16
    %s19 = sphi 0, %s17
    %s20 = sphi 0, %s18
    %s21 = sphi 0, %s19
    %s31 = sphi 0, %s33
    %s34 = sphi 0, %s31
    %s35 = sphi 0, %s34
    %s51 = sphi 0, %s35
    %s55 = sphi 0, %s55
    %s57 = sphi 0, %s55
    %s58 = sphi 0, %s57
    %s72 = sphi 0, %s58
    %s76 = sphi 0, %s76
    %s78 = sphi 0, %s76
    %s79 = sphi 0, %s78
    %s93 = sphi 0, %s79
    %s101 = sphi 0, %s103
    %s104 = sphi 0, %s101
    %s105 = sphi 0, %s104
    %s121 = sphi 0, %s105
  $region4: #{cnn_forward.4} parent=0 // loop_header_branch
    %12 = sbr.rel (%p10) target = $region8
  $region5: #{cnn_forward.4} parent=0 // loop_body
    %s14 = ssub.s32 %s9, 1
    %s15 = ssub.s32 %s9, 2
    %s22 = sadd.s32 1, %s17
    %p23 = scmp.ge.s32.totalorder %s22, 5
    %s24 = scalar_select %p23, 0, %s22
    %s25 = sadd.s32 1, %s16
    %s26 = scalar_select %p23, %s25, %s16
    %p27 = scmp.ge.s32.totalorder %s26, 2
    %s28 = scalar_select %p27, 0, %s26
    %s29 = ssub.s32 %s16, %s28
    %p30 = scmp.eq.s32.totalorder %s29, 0
    %s32 = sadd.s32 %s31, 1
    %s33 = scalar_select %p30, %s31, %s32
    %p36 = pneg %p30
    %p37 = scmp.eq.s32.totalorder %s9, 9
    %p38 = por %p36, %p37
    %p39 = scmp.ne.s32.totalorder %s31, %s34
    %p40 = scmp.eq.s32.totalorder %s9, 0
    %p41 = por %p39, %p40
    %p42 = scmp.ne.s32.totalorder %s31, %s34
    %p43 = scmp.eq.s32.totalorder %s14, 9
    %p44 = por %p42, %p43
    %p45 = scmp.ne.s32.totalorder %s34, %s35
    %p46 = scmp.eq.s32.totalorder %s14, 0
    %p47 = por %p45, %p46
    %p48 = scmp.ne.s32.totalorder %s34, %s35
    %p49 = scmp.eq.s32.totalorder %s15, 9
    %p50 = por %p48, %p49
    %p52 = scmp.ne.s32.totalorder %s35, %s51
    %p53 = scmp.eq.s32.totalorder %s15, 0
    %p54 = por %p52, %p53
    %s56 = sadd.s32 %s55, 1
    %p59 = scmp.eq.s32.totalorder %s9, 9
    %p60 = scmp.ne.s32.totalorder %s55, %s57
    %p61 = scmp.eq.s32.totalorder %s9, 0
    %p62 = por %p60, %p61
    %p63 = scmp.ne.s32.totalorder %s55, %s57
    %p64 = scmp.eq.s32.totalorder %s14, 9
    %p65 = por %p63, %p64
    %p66 = scmp.ne.s32.totalorder %s57, %s58
    %p67 = scmp.eq.s32.totalorder %s14, 0
    %p68 = por %p66, %p67
    %p69 = scmp.ne.s32.totalorder %s57, %s58
    %p70 = scmp.eq.s32.totalorder %s15, 9
    %p71 = por %p69, %p70
    %p73 = scmp.ne.s32.totalorder %s58, %s72
    %p74 = scmp.eq.s32.totalorder %s15, 0
    %p75 = por %p73, %p74
    %s77 = sadd.s32 %s76, 1
    %p80 = scmp.eq.s32.totalorder %s9, 9
    %p81 = scmp.ne.s32.totalorder %s76, %s78
    %p82 = scmp.eq.s32.totalorder %s9, 0
    %p83 = por %p81, %p82
    %p84 = scmp.ne.s32.totalorder %s76, %s78
    %p85 = scmp.eq.s32.totalorder %s14, 9
    %p86 = por %p84, %p85
    %p87 = scmp.ne.s32.totalorder %s78, %s79
    %p88 = scmp.eq.s32.totalorder %s14, 0
    %p89 = por %p87, %p88
    %p90 = scmp.ne.s32.totalorder %s78, %s79
    %p91 = scmp.eq.s32.totalorder %s15, 9
    %p92 = por %p90, %p91
    %p94 = scmp.ne.s32.totalorder %s79, %s93
    %p95 = scmp.eq.s32.totalorder %s15, 0
    %p96 = por %p94, %p95
    %s97 = ssub.s32 %s16, %s28
    %s98 = ssub.s32 %s17, %s24
    %s99 = sor.u32 %s97, %s98
    %p100 = scmp.eq.s32.totalorder %s99, 0
    %s102 = sadd.s32 %s101, 1
    %s103 = scalar_select %p100, %s101, %s102
    %p106 = pneg %p100
    %p107 = scmp.eq.s32.totalorder %s9, 9
    %p108 = por %p106, %p107
    %p109 = scmp.ne.s32.totalorder %s101, %s104
    %p110 = scmp.eq.s32.totalorder %s9, 0
    %p111 = por %p109, %p110
    %p112 = scmp.ne.s32.totalorder %s101, %s104
    %p113 = scmp.eq.s32.totalorder %s14, 9
    %p114 = por %p112, %p113
    %p115 = scmp.ne.s32.totalorder %s104, %s105
    %p116 = scmp.eq.s32.totalorder %s14, 0
    %p117 = por %p115, %p116
    %p118 = scmp.ne.s32.totalorder %s104, %s105
    %p119 = scmp.eq.s32.totalorder %s15, 9
    %p120 = por %p118, %p119
    %p122 = scmp.ne.s32.totalorder %s105, %s121
    %p123 = scmp.eq.s32.totalorder %s15, 0
    %p124 = por %p122, %p123
    %p125 = scmp.le.s32.totalorder 1, %s9
    %p126 = scmp.lt.s32.totalorder %s9, 11
    %p127 = pnand %p125, %p126
    %p128 = pneg %p127
    // Predicated region
    $region9: #{cnn_forward.4} parent=5 // pred_check
      _
    $region10: #{cnn_forward.4} parent=5 // pred_check_branch
      %130 = sbr.rel (%p127) target = $region12
    $region11: #{cnn_forward.4} parent=5 // pred_region
      %s131 = ssub.s32 %s9, 1
      // Predicated region
      $region13: #{cnn_forward.4} parent=11 // pred_check
        %p132 = pneg %p68
      $region14: #{cnn_forward.4} parent=11 // pred_check_branch
        %134 = sbr.rel (%p132) target = $region16
      $region15: #{cnn_forward.4} parent=11 // pred_region
        _
      $region16: #{cnn_forward.4} parent=11 // pred_fallthru
        _
      // Predicated region
      $region17: #{cnn_forward.4} parent=11 // pred_check
        %p135 = pneg %p89
      $region18: #{cnn_forward.4} parent=11 // pred_check_branch
        %137 = sbr.rel (%p135) target = $region20
      $region19: #{cnn_forward.4} parent=11 // pred_region
        _
      $region20: #{cnn_forward.4} parent=11 // pred_fallthru
        _
    $region12: #{cnn_forward.4} parent=5 // pred_fallthru
      _
    %p138 = scmp.lt.s32.totalorder %s9, 10
    // Predicated region
    $region21: #{cnn_forward.4} parent=5 // pred_check
      %p139 = pneg %p138
    $region22: #{cnn_forward.4} parent=5 // pred_check_branch
      %141 = sbr.rel (%p139) target = $region24
    $region23: #{cnn_forward.4} parent=5 // pred_region
      // Predicated region
      $region25: #{cnn_forward.4} parent=23 // pred_check
        %p142 = pneg %p41
      $region26: #{cnn_forward.4} parent=23 // pred_check_branch
        %144 = sbr.rel (%p142) target = $region28
      $region27: #{cnn_forward.4} parent=23 // pred_region
        %p145 = scmp.lt.s32.totalorder %s16, 1
        %s146 = scalar_select %p145, %s16, 1
        %s147 = smul.addr %s146, 13
        %s148 = smul.addr %s147, 8
        %s149 = scalar_lea.vmem %s0, %s148
      $region28: #{cnn_forward.4} parent=23 // pred_fallthru
        _
    $region24: #{cnn_forward.4} parent=5 // pred_fallthru
      _
    %p150 = scmp.le.s32.totalorder 1, %s9
    %p151 = scmp.lt.s32.totalorder %s9, 11
    %p152 = pnand %p150, %p151
    %p153 = pneg %p152
    // Predicated region
    $region29: #{cnn_forward.4} parent=5 // pred_check
      _
    $region30: #{cnn_forward.4} parent=5 // pred_check_branch
      %155 = sbr.rel (%p152) target = $region32
    $region31: #{cnn_forward.4} parent=5 // pred_region
      %s156 = ssub.s32 %s9, 1
      %p157 = scmp.lt.s32.totalorder %s18, 1
      %s158 = scalar_select %p157, %s18, 1
      %s159 = smul.addr %s158, 13
      %s160 = smul.addr %s159, 8
      %s161 = scalar_lea.vmem %s0, %s160
      %p162 = pneg %p47
      %p163 = pneg %p44
      %p164 = pneg %p68
      %p165 = pneg %p65
      %p166 = pneg %p89
      %p167 = pneg %p86
      %p168 = pneg %p117
      %p169 = pneg %p114
      %p170 = scmp.lt.s32.totalorder %s18, 1
      %s171 = scalar_select %p170, %s18, 1
      %p172 = scmp.lt.s32.totalorder %s19, 4
      %s173 = scalar_select %p172, %s19, 4
      %s174 = smul.addr %s171, 5
      %s175 = sadd.s32 %s173, %s174
      %s176 = smul.addr %s175, 8
      %s177 = scalar_lea.vmem %s3, %s176
      %p178 = scmp.lt.s32.totalorder %s18, 1
      %s179 = scalar_select %p178, %s18, 1
      %s180 = smul.addr %s179, 13
      %s181 = smul.addr %s180, 8
      %s182 = scalar_lea.vmem %s0, %s181
      %p183 = scmp.lt.s32.totalorder %s18, 1
      %s184 = scalar_select %p183, %s18, 1
      %p185 = scmp.lt.s32.totalorder %s19, 4
      %s186 = scalar_select %p185, %s19, 4
      %s187 = smul.addr %s184, 5
      %s188 = sadd.s32 %s186, %s187
      %s189 = smul.addr %s188, 8
      %s190 = scalar_lea.vmem %s3, %s189
      %s192 = smul.u32 %s19, 2
      %s193 = smul.u32 %s192, 8
      %s194 = scalar_lea.vmem %s182, %s193
      %v195 = vld [vmem:[%s194] sm:$0x1f]
      %v196 = vpack.c.bf16 %v195, %v195
      %v197 = vld [vmem:[%s1] sm:$0xf]
      %v198 = vld [vmem:[%s1 + $0x4] sm:$0xf]
      %v199 = vld [vmem:[%s1 + $0x8] sm:$0xf]
      %v200 = vld [vmem:[%s1 + $0xc] sm:$0xf]
      %v201 = vld [vmem:[%s1 + $0x10] sm:$0xf]
      %v202 = vld [vmem:[%s1 + $0x14] sm:$0xf]
      %v203 = vld [vmem:[%s1 + $0x18] sm:$0xf]
      %v204 = vld [vmem:[%s1 + $0x1c] sm:$0xf]
      %v205 = vld [vmem:[%s194 + $0x1] sm:$0x1f]
      %v206 = vpack.c.bf16 %v205, %v205
      %s207 = scalar_lea.vmem %s1, 32
      %v208 = vld [vmem:[%s207] sm:$0xf]
      %v209 = vld [vmem:[%s207 + $0x4] sm:$0xf]
      %v210 = vld [vmem:[%s207 + $0x8] sm:$0xf]
      %v211 = vld [vmem:[%s207 + $0xc] sm:$0xf]
      %v212 = vld [vmem:[%s207 + $0x10] sm:$0xf]
      %v213 = vld [vmem:[%s207 + $0x14] sm:$0xf]
      %v214 = vld [vmem:[%s207 + $0x18] sm:$0xf]
      %v215 = vld [vmem:[%s207 + $0x1c] sm:$0xf]
      %v224 = vunpack.c.l.b16 %v208
      %v225 = vunpack.c.l.b16 %v209
      %v226 = vunpack.c.l.b16 %v210
      %v227 = vunpack.c.l.b16 %v211
      %v228 = vunpack.c.l.b16 %v212
      %v229 = vunpack.c.l.b16 %v213
      %v230 = vunpack.c.l.b16 %v214
      %v231 = vunpack.c.l.b16 %v215
      %v232 = vpack.c.b16 %v225, %v224
      %v233 = vpack.c.b16 %v227, %v226
      %v234 = vpack.c.b16 %v229, %v228
      %v235 = vpack.c.b16 %v231, %v230
      %vm240 = vcmask 523264
      %v242 = vsel %vm240, %v206, 0
      %244 = vmatpush.bf16.msra.mxu0 0
      %245 = vmatpush.bf16.msra.mxu0 0
      %246 = vmatpush.bf16.msra.mxu0 0
      %247 = vmatpush.bf16.msra.mxu0 0
      %248 = vmatpush.bf16.msra.mxu0 %v235
      %249 = vmatpush.bf16.msra.mxu0 %v234
      %250 = vmatpush.bf16.msra.mxu0 %v233
      %251 = vmatpush.bf16.msra.mxu0 %v232
      %252 = vmatmul.bf16.gmra.mxu0 %v242
      %v253 = vpop.f32.mrf.mxu0
      %v254 = vadd.f32 0.0, %v253
      %v255 = vpop.f32.mrf.mxu0
      %256 = vdwg.mxu0
      %v265 = vunpack.c.l.b16 %v197
      %v266 = vunpack.c.l.b16 %v198
      %v267 = vunpack.c.l.b16 %v199
      %v268 = vunpack.c.l.b16 %v200
      %v269 = vunpack.c.l.b16 %v201
      %v270 = vunpack.c.l.b16 %v202
      %v271 = vunpack.c.l.b16 %v203
      %v272 = vunpack.c.l.b16 %v204
      %v273 = vpack.c.b16 %v266, %v265
      %v274 = vpack.c.b16 %v268, %v267
      %v275 = vpack.c.b16 %v270, %v269
      %v276 = vpack.c.b16 %v272, %v271
      %v282 = vsel %vm240, %v196, 0
      %284 = vmatpush.bf16.msra.mxu0 0
      %285 = vmatpush.bf16.msra.mxu0 0
      %286 = vmatpush.bf16.msra.mxu0 0
      %287 = vmatpush.bf16.msra.mxu0 0
      %288 = vmatpush.bf16.msra.mxu0 %v276
      %289 = vmatpush.bf16.msra.mxu0 %v275
      %290 = vmatpush.bf16.msra.mxu0 %v274
      %291 = vmatpush.bf16.msra.mxu0 %v273
      %292 = vmatmul.bf16.gmra.mxu0 %v282
      %v293 = vpop.f32.mrf.mxu0
      %v294 = vadd.f32 %v254, %v293
      %v295 = vpop.f32.mrf.mxu0
      %296 = vdwg.mxu0
      %s297 = sadd.s32 %s192, 1
      %s298 = smul.u32 %s297, 8
      %s299 = scalar_lea.vmem %s182, %s298
      %v300 = vld [vmem:[%s299] sm:$0x1f]
      %v301 = vpack.c.bf16 %v300, %v300
      %s302 = scalar_lea.vmem %s1, 64
      %v303 = vld [vmem:[%s302] sm:$0xf]
      %v304 = vld [vmem:[%s302 + $0x4] sm:$0xf]
      %v305 = vld [vmem:[%s302 + $0x8] sm:$0xf]
      %v306 = vld [vmem:[%s302 + $0xc] sm:$0xf]
      %v307 = vld [vmem:[%s302 + $0x10] sm:$0xf]
      %v308 = vld [vmem:[%s302 + $0x14] sm:$0xf]
      %v309 = vld [vmem:[%s302 + $0x18] sm:$0xf]
      %v310 = vld [vmem:[%s302 + $0x1c] sm:$0xf]
      %v319 = vunpack.c.l.b16 %v303
      %v320 = vunpack.c.l.b16 %v304
      %v321 = vunpack.c.l.b16 %v305
      %v322 = vunpack.c.l.b16 %v306
      %v323 = vunpack.c.l.b16 %v307
      %v324 = vunpack.c.l.b16 %v308
      %v325 = vunpack.c.l.b16 %v309
      %v326 = vunpack.c.l.b16 %v310
      %v327 = vpack.c.b16 %v320, %v319
      %v328 = vpack.c.b16 %v322, %v321
      %v329 = vpack.c.b16 %v324, %v323
      %v330 = vpack.c.b16 %v326, %v325
      %v336 = vsel %vm240, %v301, 0
      %338 = vmatpush.bf16.msra.mxu0 0
      %339 = vmatpush.bf16.msra.mxu0 0
      %340 = vmatpush.bf16.msra.mxu0 0
      %341 = vmatpush.bf16.msra.mxu0 0
      %342 = vmatpush.bf16.msra.mxu0 %v330
      %343 = vmatpush.bf16.msra.mxu0 %v329
      %344 = vmatpush.bf16.msra.mxu0 %v328
      %345 = vmatpush.bf16.msra.mxu0 %v327
      %346 = vmatmul.bf16.gmra.mxu0 %v336
      %v347 = vpop.f32.mrf.mxu0
      %v348 = vadd.f32 0.0, %v347
      %v349 = vpop.f32.mrf.mxu0
      %350 = vdwg.mxu0
      %v351 = vadd.f32 %v294, %v348
      %v352 = vld [vmem:[%s299 + $0x1] sm:$0x1f]
      %v353 = vpack.c.bf16 %v352, %v352
      %s354 = scalar_lea.vmem %s1, 96
      %v355 = vld [vmem:[%s354] sm:$0xf]
      %v356 = vld [vmem:[%s354 + $0x4] sm:$0xf]
      %v357 = vld [vmem:[%s354 + $0x8] sm:$0xf]
      %v358 = vld [vmem:[%s354 + $0xc] sm:$0xf]
      %v359 = vld [vmem:[%s354 + $0x10] sm:$0xf]
      %v360 = vld [vmem:[%s354 + $0x14] sm:$0xf]
      %v361 = vld [vmem:[%s354 + $0x18] sm:$0xf]
      %v362 = vld [vmem:[%s354 + $0x1c] sm:$0xf]
      %v371 = vunpack.c.l.b16 %v355
      %v372 = vunpack.c.l.b16 %v356
      %v373 = vunpack.c.l.b16 %v357
      %v374 = vunpack.c.l.b16 %v358
      %v375 = vunpack.c.l.b16 %v359
      %v376 = vunpack.c.l.b16 %v360
      %v377 = vunpack.c.l.b16 %v361
      %v378 = vunpack.c.l.b16 %v362
      %v379 = vpack.c.b16 %v372, %v371
      %v380 = vpack.c.b16 %v374, %v373
      %v381 = vpack.c.b16 %v376, %v375
      %v382 = vpack.c.b16 %v378, %v377
      %v388 = vsel %vm240, %v353, 0
      %390 = vmatpush.bf16.msra.mxu0 0
      %391 = vmatpush.bf16.msra.mxu0 0
      %392 = vmatpush.bf16.msra.mxu0 0
      %393 = vmatpush.bf16.msra.mxu0 0
      %394 = vmatpush.bf16.msra.mxu0 %v382
      %395 = vmatpush.bf16.msra.mxu0 %v381
      %396 = vmatpush.bf16.msra.mxu0 %v380
      %397 = vmatpush.bf16.msra.mxu0 %v379
      %398 = vmatmul.bf16.gmra.mxu0 %v388
      %v399 = vpop.f32.mrf.mxu0
      %v400 = vadd.f32 0.0, %v399
      %v401 = vpop.f32.mrf.mxu0
      %402 = vdwg.mxu0
      %v403 = vadd.f32 %v351, %v400
      %s404 = sadd.s32 %s192, 2
      %s405 = smul.u32 %s404, 8
      %s406 = scalar_lea.vmem %s182, %s405
      %v407 = vld [vmem:[%s406] sm:$0x1f]
      %v408 = vpack.c.bf16 %v407, %v407
      %s409 = scalar_lea.vmem %s1, 128
      %v410 = vld [vmem:[%s409] sm:$0xf]
      %v411 = vld [vmem:[%s409 + $0x4] sm:$0xf]
      %v412 = vld [vmem:[%s409 + $0x8] sm:$0xf]
      %v413 = vld [vmem:[%s409 + $0xc] sm:$0xf]
      %v414 = vld [vmem:[%s409 + $0x10] sm:$0xf]
      %v415 = vld [vmem:[%s409 + $0x14] sm:$0xf]
      %v416 = vld [vmem:[%s409 + $0x18] sm:$0xf]
      %v417 = vld [vmem:[%s409 + $0x1c] sm:$0xf]
      %v426 = vunpack.c.l.b16 %v410
      %v427 = vunpack.c.l.b16 %v411
      %v428 = vunpack.c.l.b16 %v412
      %v429 = vunpack.c.l.b16 %v413
      %v430 = vunpack.c.l.b16 %v414
      %v431 = vunpack.c.l.b16 %v415
      %v432 = vunpack.c.l.b16 %v416
      %v433 = vunpack.c.l.b16 %v417
      %v434 = vpack.c.b16 %v427, %v426
      %v435 = vpack.c.b16 %v429, %v428
      %v436 = vpack.c.b16 %v431, %v430
      %v437 = vpack.c.b16 %v433, %v432
      %v443 = vsel %vm240, %v408, 0
      %445 = vmatpush.bf16.msra.mxu0 0
      %446 = vmatpush.bf16.msra.mxu0 0
      %447 = vmatpush.bf16.msra.mxu0 0
      %448 = vmatpush.bf16.msra.mxu0 0
      %449 = vmatpush.bf16.msra.mxu0 %v437
      %450 = vmatpush.bf16.msra.mxu0 %v436
      %451 = vmatpush.bf16.msra.mxu0 %v435
      %452 = vmatpush.bf16.msra.mxu0 %v434
      %453 = vmatmul.bf16.gmra.mxu0 %v443
      %v454 = vpop.f32.mrf.mxu0
      %v455 = vadd.f32 0.0, %v454
      %v456 = vpop.f32.mrf.mxu0
      %457 = vdwg.mxu0
      %v458 = vadd.f32 %v403, %v455
      %v459 = vld [vmem:[%s406 + $0x1] sm:$0x1f]
      %v460 = vpack.c.bf16 %v459, %v459
      %s461 = scalar_lea.vmem %s1, 160
      %v462 = vld [vmem:[%s461] sm:$0xf]
      %v463 = vld [vmem:[%s461 + $0x4] sm:$0xf]
      %v464 = vld [vmem:[%s461 + $0x8] sm:$0xf]
      %v465 = vld [vmem:[%s461 + $0xc] sm:$0xf]
      %v466 = vld [vmem:[%s461 + $0x10] sm:$0xf]
      %v467 = vld [vmem:[%s461 + $0x14] sm:$0xf]
      %v468 = vld [vmem:[%s461 + $0x18] sm:$0xf]
      %v469 = vld [vmem:[%s461 + $0x1c] sm:$0xf]
      %v478 = vunpack.c.l.b16 %v462
      %v479 = vunpack.c.l.b16 %v463
      %v480 = vunpack.c.l.b16 %v464
      %v481 = vunpack.c.l.b16 %v465
      %v482 = vunpack.c.l.b16 %v466
      %v483 = vunpack.c.l.b16 %v467
      %v484 = vunpack.c.l.b16 %v468
      %v485 = vunpack.c.l.b16 %v469
      %v486 = vpack.c.b16 %v479, %v478
      %v487 = vpack.c.b16 %v481, %v480
      %v488 = vpack.c.b16 %v483, %v482
      %v489 = vpack.c.b16 %v485, %v484
      %v495 = vsel %vm240, %v460, 0
      %497 = vmatpush.bf16.msra.mxu0 0
      %498 = vmatpush.bf16.msra.mxu0 0
      %499 = vmatpush.bf16.msra.mxu0 0
      %500 = vmatpush.bf16.msra.mxu0 0
      %501 = vmatpush.bf16.msra.mxu0 %v489
      %502 = vmatpush.bf16.msra.mxu0 %v488
      %503 = vmatpush.bf16.msra.mxu0 %v487
      %504 = vmatpush.bf16.msra.mxu0 %v486
      %505 = vmatmul.bf16.gmra.mxu0 %v495
      %v506 = vpop.f32.mrf.mxu0
      %v507 = vadd.f32 0.0, %v506
      %v508 = vpop.f32.mrf.mxu0
      %509 = vdwg.mxu0
      %v510 = vadd.f32 %v458, %v507
      %511 = vmatpush.bf16.msra.mxu0 0
      %512 = vmatpush.bf16.msra.mxu0 0
      %513 = vmatpush.bf16.msra.mxu0 0
      %514 = vmatpush.bf16.msra.mxu0 0
      %515 = vmatpush.bf16.msra.mxu0 %v235
      %516 = vmatpush.bf16.msra.mxu0 %v234
      %517 = vmatpush.bf16.msra.mxu0 %v233
      %518 = vmatpush.bf16.msra.mxu0 %v232
      %519 = vmatmul.bf16.gmra.mxu0 %v388
      %v520 = vpop.f32.mrf.mxu0
      %v521 = vadd.f32 0.0, %v520
      %v522 = vpop.f32.mrf.mxu0
      %523 = vdwg.mxu0
      %524 = vmatpush.bf16.msra.mxu0 0
      %525 = vmatpush.bf16.msra.mxu0 0
      %526 = vmatpush.bf16.msra.mxu0 0
      %527 = vmatpush.bf16.msra.mxu0 0
      %528 = vmatpush.bf16.msra.mxu0 %v276
      %529 = vmatpush.bf16.msra.mxu0 %v275
      %530 = vmatpush.bf16.msra.mxu0 %v274
      %531 = vmatpush.bf16.msra.mxu0 %v273
      %532 = vmatmul.bf16.gmra.mxu0 %v336
      %v533 = vpop.f32.mrf.mxu0
      %v534 = vadd.f32 %v521, %v533
      %v535 = vpop.f32.mrf.mxu0
      %536 = vdwg.mxu0
      %537 = vmatpush.bf16.msra.mxu0 0
      %538 = vmatpush.bf16.msra.mxu0 0
      %539 = vmatpush.bf16.msra.mxu0 0
      %540 = vmatpush.bf16.msra.mxu0 0
      %541 = vmatpush.bf16.msra.mxu0 %v330
      %542 = vmatpush.bf16.msra.mxu0 %v329
      %543 = vmatpush.bf16.msra.mxu0 %v328
      %544 = vmatpush.bf16.msra.mxu0 %v327
      %545 = vmatmul.bf16.gmra.mxu0 %v443
      %v546 = vpop.f32.mrf.mxu0
      %v547 = vadd.f32 0.0, %v546
      %v548 = vpop.f32.mrf.mxu0
      %549 = vdwg.mxu0
      %v550 = vadd.f32 %v534, %v547
      %551 = vmatpush.bf16.msra.mxu0 0
      %552 = vmatpush.bf16.msra.mxu0 0
      %553 = vmatpush.bf16.msra.mxu0 0
      %554 = vmatpush.bf16.msra.mxu0 0
      %555 = vmatpush.bf16.msra.mxu0 %v382
      %556 = vmatpush.bf16.msra.mxu0 %v381
      %557 = vmatpush.bf16.msra.mxu0 %v380
      %558 = vmatpush.bf16.msra.mxu0 %v379
      %559 = vmatmul.bf16.gmra.mxu0 %v495
      %v560 = vpop.f32.mrf.mxu0
      %v561 = vadd.f32 0.0, %v560
      %v562 = vpop.f32.mrf.mxu0
      %563 = vdwg.mxu0
      %v564 = vadd.f32 %v550, %v561
      %s565 = sadd.s32 %s192, 3
      %s566 = smul.u32 %s565, 8
      %s567 = scalar_lea.vmem %s182, %s566
      %v568 = vld [vmem:[%s567] sm:$0x1f]
      %v569 = vpack.c.bf16 %v568, %v568
      %v571 = vsel %vm240, %v569, 0
      %573 = vmatpush.bf16.msra.mxu0 0
      %574 = vmatpush.bf16.msra.mxu0 0
      %575 = vmatpush.bf16.msra.mxu0 0
      %576 = vmatpush.bf16.msra.mxu0 0
      %577 = vmatpush.bf16.msra.mxu0 %v437
      %578 = vmatpush.bf16.msra.mxu0 %v436
      %579 = vmatpush.bf16.msra.mxu0 %v435
      %580 = vmatpush.bf16.msra.mxu0 %v434
      %581 = vmatmul.bf16.gmra.mxu0 %v571
      %v582 = vpop.f32.mrf.mxu0
      %v583 = vadd.f32 0.0, %v582
      %v584 = vpop.f32.mrf.mxu0
      %585 = vdwg.mxu0
      %v586 = vadd.f32 %v564, %v583
      %v587 = vld [vmem:[%s567 + $0x1] sm:$0x1f]
      %v588 = vpack.c.bf16 %v587, %v587
      %v590 = vsel %vm240, %v588, 0
      %592 = vmatpush.bf16.msra.mxu0 0
      %593 = vmatpush.bf16.msra.mxu0 0
      %594 = vmatpush.bf16.msra.mxu0 0
      %595 = vmatpush.bf16.msra.mxu0 0
      %596 = vmatpush.bf16.msra.mxu0 %v489
      %597 = vmatpush.bf16.msra.mxu0 %v488
      %598 = vmatpush.bf16.msra.mxu0 %v487
      %599 = vmatpush.bf16.msra.mxu0 %v486
      %600 = vmatmul.bf16.gmra.mxu0 %v590
      %v601 = vpop.f32.mrf.mxu0
      %v602 = vadd.f32 0.0, %v601
      %v603 = vpop.f32.mrf.mxu0
      %604 = vdwg.mxu0
      %v605 = vadd.f32 %v586, %v602
      %v606 = vmax.f32 %v510, %v605
      %v607 = vld [vmem:[%s2] sm:$0x1]
      %v609 = vperm.slane %v607, 0
      %v611 = vadd.f32 %v606, %v609
      %v612 = vmax.f32 %v611, 0.0
      %614 = vrot.lane.b32.xlu0 %v612, 64
      %v615 = vpop.permute.xlu0 %614
      %v617 = vmax.f32 %v612, %v615
      %vm618 = vcmask 520192
      %619 = vst.msk [vmem:[%s190] sm:$0x1f] %vm618, %v617
      %p620 = scmp.lt.s32.totalorder %s18, 1
      %s621 = scalar_select %p620, %s18, 1
      %p622 = scmp.lt.s32.totalorder %s19, 4
      %s623 = scalar_select %p622, %s19, 4
      %s624 = smul.addr %s621, 5
      %s625 = sadd.s32 %s623, %s624
      %s626 = smul.addr %s625, 8
      %s627 = scalar_lea.vmem %s3, %s626
      // Predicated region
      $region33: #{cnn_forward.4} parent=31 // pred_check
        %p628 = pneg %p114
      $region34: #{cnn_forward.4} parent=31 // pred_check_branch
        %630 = sbr.rel (%p628) target = $region36
      $region35: #{cnn_forward.4} parent=31 // pred_region
        _
      $region36: #{cnn_forward.4} parent=31 // pred_fallthru
        _
    $region32: #{cnn_forward.4} parent=5 // pred_fallthru
      _
    %p631 = scmp.le.s32.totalorder 2, %s9
    // Predicated region
    $region37: #{cnn_forward.4} parent=5 // pred_check
      %p632 = pneg %p631
    $region38: #{cnn_forward.4} parent=5 // pred_check_branch
      %634 = sbr.rel (%p632) target = $region40
    $region39: #{cnn_forward.4} parent=5 // pred_region
      %s635 = ssub.s32 %s9, 2
      // Predicated region
      $region41: #{cnn_forward.4} parent=39 // pred_check
        %p636 = pneg %p120
      $region42: #{cnn_forward.4} parent=39 // pred_check_branch
        %638 = sbr.rel (%p636) target = $region44
      $region43: #{cnn_forward.4} parent=39 // pred_region
        %p639 = scmp.lt.s32.totalorder %s20, 1
        %s640 = scalar_select %p639, %s20, 1
        %p641 = scmp.lt.s32.totalorder %s21, 4
        %s642 = scalar_select %p641, %s21, 4
        %s643 = smul.addr %s640, 5
        %s644 = sadd.s32 %s642, %s643
        %s645 = smul.addr %s644, 8
        %s646 = scalar_lea.vmem %s3, %s645
      $region44: #{cnn_forward.4} parent=39 // pred_fallthru
        _
    $region40: #{cnn_forward.4} parent=5 // pred_fallthru
      _
  $region6: #{cnn_forward.4} parent=0 // loop_footer
    %s13 = sadd.s32 1, %s9
  $region7: #{cnn_forward.4} parent=0 // loop_footer_branch
    %8 = sbr.rel target = $region3
  $region8: #{cnn_forward.4} parent=0 // loop_exit
    _

// kernel: cnn_forward.5
$region0: #{cnn_forward.5}
  #allocation0 [shape = 'u32[]', space=smem, size = 0x4, offset = 0x4, fixed_abs, tag = 'smem constant byte address 0x4 - core index']
  #allocation1 [shape = 'u32[72,128]{1,0:T(1,128)}', space=vmem, size = 0x9000, scoped, tag = 'internal scratch']
  %s0 = inlined_call_operand.vmem [shape: f32[8,1600], index: 0, kind: input, shape index: {}]
  %s1 = inlined_call_operand.vmem [shape: bf16[1600,128], index: 1, kind: input, shape index: {}]
  %s2 = inlined_call_operand.vmem [shape: f32[1,128], index: 2, kind: input, shape index: {}]
  %s3 = inlined_call_operand.vmem [shape: bf16[128,128], index: 3, kind: input, shape index: {}]
  %s4 = inlined_call_operand.vmem [shape: f32[1,128], index: 4, kind: input, shape index: {}]
  %s5 = inlined_call_operand.vmem [shape: f32[8,128], index: 5, kind: output, shape index: {}]
  %s6 = sld [smem:[#allocation0]]
  $region30: #{cnn_forward.5} parent=0
    _
  %s8 = ssub.s32 1, %s6
  %s9 = scalar_select 0, %s8, %s6
  // Predicated region
  $region2: #{cnn_forward.5} parent=0 // pred_check
    _
  $region3: #{cnn_forward.5} parent=0 // pred_check_branch
    %11 = sbr.rel (0) target = $region5
  $region4: #{cnn_forward.5} parent=0 // pred_region
    _
  $region5: #{cnn_forward.5} parent=0 // pred_fallthru
    _
  // Predicated region
  $region6: #{cnn_forward.5} parent=0 // pred_check
    _
  $region7: #{cnn_forward.5} parent=0 // pred_check_branch
    %13 = sbr.rel (0) target = $region9
  $region8: #{cnn_forward.5} parent=0 // pred_region
    _
  $region9: #{cnn_forward.5} parent=0 // pred_fallthru
    _
  // Predicated region
  $region10: #{cnn_forward.5} parent=0 // pred_check
    _
  $region11: #{cnn_forward.5} parent=0 // pred_check_branch
    %15 = sbr.rel (0) target = $region13
  $region12: #{cnn_forward.5} parent=0 // pred_region
    _
  $region13: #{cnn_forward.5} parent=0 // pred_fallthru
    _
  // Predicated region
  $region14: #{cnn_forward.5} parent=0 // pred_check
    _
  $region15: #{cnn_forward.5} parent=0 // pred_check_branch
    %17 = sbr.rel (0) target = $region17
  $region16: #{cnn_forward.5} parent=0 // pred_region
    _
  $region17: #{cnn_forward.5} parent=0 // pred_fallthru
    _
  // Predicated region
  $region18: #{cnn_forward.5} parent=0 // pred_check
    _
  $region19: #{cnn_forward.5} parent=0 // pred_check_branch
    %19 = sbr.rel (0) target = $region21
  $region20: #{cnn_forward.5} parent=0 // pred_region
    _
  $region21: #{cnn_forward.5} parent=0 // pred_fallthru
    _
  %v21 = vld [vmem:[%s0] sm:$0xff]
  %v22 = vld [vmem:[%s0 + $0x8] sm:$0xff]
  %v23 = vld [vmem:[%s0 + $0x10] sm:$0xff]
  %v24 = vld [vmem:[%s0 + $0x18] sm:$0xff]
  %v25 = vld [vmem:[%s0 + $0x20] sm:$0xff]
  %v26 = vld [vmem:[%s0 + $0x28] sm:$0xff]
  %v27 = vld [vmem:[%s0 + $0x30] sm:$0xff]
  %v28 = vld [vmem:[%s0 + $0x38] sm:$0xff]
  %v29 = vld [vmem:[%s0 + $0x40] sm:$0xff]
  %v30 = vld [vmem:[%s0 + $0x48] sm:$0xff]
  %v31 = vld [vmem:[%s0 + $0x50] sm:$0xff]
  %v32 = vld [vmem:[%s0 + $0x58] sm:$0xff]
  %v33 = vld [vmem:[%s0 + $0x60] sm:$0xff]
  %v34 = vpack.c.bf16 %v21, %v21
  %v35 = vpack.c.bf16 %v22, %v22
  %v36 = vpack.c.bf16 %v23, %v23
  %v37 = vpack.c.bf16 %v24, %v24
  %v38 = vpack.c.bf16 %v25, %v25
  %v39 = vpack.c.bf16 %v26, %v26
  %v40 = vpack.c.bf16 %v27, %v27
  %v41 = vpack.c.bf16 %v28, %v28
  %v42 = vpack.c.bf16 %v29, %v29
  %v43 = vpack.c.bf16 %v30, %v30
  %v44 = vpack.c.bf16 %v31, %v31
  %v45 = vpack.c.bf16 %v32, %v32
  %v46 = vpack.c.bf16 %v33, %v33
  %v47 = vld [vmem:[%s1] sm:$0xf]
  %v48 = vld [vmem:[%s1 + $0x4] sm:$0xf]
  %v49 = vld [vmem:[%s1 + $0x8] sm:$0xf]
  %v50 = vld [vmem:[%s1 + $0xc] sm:$0xf]
  %v51 = vld [vmem:[%s1 + $0x10] sm:$0xf]
  %v52 = vld [vmem:[%s1 + $0x14] sm:$0xf]
  %v53 = vld [vmem:[%s1 + $0x18] sm:$0xf]
  %v54 = vld [vmem:[%s1 + $0x1c] sm:$0xf]
  %v55 = vld [vmem:[%s1 + $0x20] sm:$0xf]
  %v56 = vld [vmem:[%s1 + $0x24] sm:$0xf]
  %v57 = vld [vmem:[%s1 + $0x28] sm:$0xf]
  %v58 = vld [vmem:[%s1 + $0x2c] sm:$0xf]
  %v59 = vld [vmem:[%s1 + $0x30] sm:$0xf]
  %v60 = vld [vmem:[%s1 + $0x34] sm:$0xf]
  %v61 = vld [vmem:[%s1 + $0x38] sm:$0xf]
  %v62 = vld [vmem:[%s1 + $0x3c] sm:$0xf]
  %v63 = vld [vmem:[%s1 + $0x40] sm:$0xf]
  %v64 = vld [vmem:[%s1 + $0x44] sm:$0xf]
  %v65 = vld [vmem:[%s1 + $0x48] sm:$0xf]
  %v66 = vld [vmem:[%s1 + $0x4c] sm:$0xf]
  %v67 = vld [vmem:[%s1 + $0x50] sm:$0xf]
  %v68 = vld [vmem:[%s1 + $0x54] sm:$0xf]
  %v69 = vld [vmem:[%s1 + $0x58] sm:$0xf]
  %v70 = vld [vmem:[%s1 + $0x5c] sm:$0xf]
  %v71 = vld [vmem:[%s1 + $0x60] sm:$0xf]
  %v72 = vld [vmem:[%s1 + $0x64] sm:$0xf]
  %v73 = vld [vmem:[%s1 + $0x68] sm:$0xf]
  %v74 = vld [vmem:[%s1 + $0x6c] sm:$0xf]
  %v75 = vld [vmem:[%s1 + $0x70] sm:$0xf]
  %v76 = vld [vmem:[%s1 + $0x74] sm:$0xf]
  %v77 = vld [vmem:[%s1 + $0x78] sm:$0xf]
  %v78 = vld [vmem:[%s1 + $0x7c] sm:$0xf]
  %v79 = vld [vmem:[%s1 + $0x80] sm:$0xf]
  %v80 = vld [vmem:[%s1 + $0x84] sm:$0xf]
  %v81 = vld [vmem:[%s1 + $0x88] sm:$0xf]
  %v82 = vld [vmem:[%s1 + $0x8c] sm:$0xf]
  %v83 = vld [vmem:[%s1 + $0x90] sm:$0xf]
  %v84 = vld [vmem:[%s1 + $0x94] sm:$0xf]
  %v85 = vld [vmem:[%s1 + $0x98] sm:$0xf]
  %v86 = vld [vmem:[%s1 + $0x9c] sm:$0xf]
  %v87 = vld [vmem:[%s1 + $0xa0] sm:$0xf]
  %v88 = vld [vmem:[%s1 + $0xa4] sm:$0xf]
  %v89 = vld [vmem:[%s1 + $0xa8] sm:$0xf]
  %v90 = vld [vmem:[%s1 + $0xac] sm:$0xf]
  %v91 = vld [vmem:[%s1 + $0xb0] sm:$0xf]
  %v92 = vld [vmem:[%s1 + $0xb4] sm:$0xf]
  %v93 = vld [vmem:[%s1 + $0xb8] sm:$0xf]
  %v94 = vld [vmem:[%s1 + $0xbc] sm:$0xf]
  %v95 = vld [vmem:[%s1 + $0xc0] sm:$0xf]
  %v96 = vld [vmem:[%s1 + $0xc4] sm:$0xf]
  %v97 = vld [vmem:[%s1 + $0xc8] sm:$0xf]
  %v98 = vld [vmem:[%s1 + $0xcc] sm:$0xf]
  %v99 = vld [vmem:[%s1 + $0xd0] sm:$0xf]
  %v100 = vld [vmem:[%s1 + $0xd4] sm:$0xf]
  %v101 = vld [vmem:[%s1 + $0xd8] sm:$0xf]
  %v102 = vld [vmem:[%s1 + $0xdc] sm:$0xf]
  %v103 = vld [vmem:[%s1 + $0xe0] sm:$0xf]
  %v104 = vld [vmem:[%s1 + $0xe4] sm:$0xf]
  %v105 = vld [vmem:[%s1 + $0xe8] sm:$0xf]
  %v106 = vld [vmem:[%s1 + $0xec] sm:$0xf]
  %v107 = vld [vmem:[%s1 + $0xf0] sm:$0xf]
  %v108 = vld [vmem:[%s1 + $0xf4] sm:$0xf]
  %v109 = vld [vmem:[%s1 + $0xf8] sm:$0xf]
  %v110 = vld [vmem:[%s1 + $0xfc] sm:$0xf]
  %v111 = vld [vmem:[%s1 + $0x100] sm:$0xf]
  %v112 = vld [vmem:[%s1 + $0x104] sm:$0xf]
  %v113 = vld [vmem:[%s1 + $0x108] sm:$0xf]
  %v114 = vld [vmem:[%s1 + $0x10c] sm:$0xf]
  %v115 = vld [vmem:[%s1 + $0x110] sm:$0xf]
  %v116 = vld [vmem:[%s1 + $0x114] sm:$0xf]
  %v117 = vld [vmem:[%s1 + $0x118] sm:$0xf]
  %v118 = vld [vmem:[%s1 + $0x11c] sm:$0xf]
  %v119 = vld [vmem:[%s1 + $0x120] sm:$0xf]
  %v120 = vld [vmem:[%s1 + $0x124] sm:$0xf]
  %v121 = vld [vmem:[%s1 + $0x128] sm:$0xf]
  %v122 = vld [vmem:[%s1 + $0x12c] sm:$0xf]
  %v123 = vld [vmem:[%s1 + $0x130] sm:$0xf]
  %v124 = vld [vmem:[%s1 + $0x134] sm:$0xf]
  %v125 = vld [vmem:[%s1 + $0x138] sm:$0xf]
  %v126 = vld [vmem:[%s1 + $0x13c] sm:$0xf]
  %v127 = vld [vmem:[%s1 + $0x140] sm:$0xf]
  %v128 = vld [vmem:[%s1 + $0x144] sm:$0xf]
  %v129 = vld [vmem:[%s1 + $0x148] sm:$0xf]
  %v130 = vld [vmem:[%s1 + $0x14c] sm:$0xf]
  %v131 = vld [vmem:[%s1 + $0x150] sm:$0xf]
  %v132 = vld [vmem:[%s1 + $0x154] sm:$0xf]
  %v133 = vld [vmem:[%s1 + $0x158] sm:$0xf]
  %v134 = vld [vmem:[%s1 + $0x15c] sm:$0xf]
  %v135 = vld [vmem:[%s1 + $0x160] sm:$0xf]
  %v136 = vld [vmem:[%s1 + $0x164] sm:$0xf]
  %v137 = vld [vmem:[%s1 + $0x168] sm:$0xf]
  %v138 = vld [vmem:[%s1 + $0x16c] sm:$0xf]
  %v139 = vld [vmem:[%s1 + $0x170] sm:$0xf]
  %v140 = vld [vmem:[%s1 + $0x174] sm:$0xf]
  %v141 = vld [vmem:[%s1 + $0x178] sm:$0xf]
  %v142 = vld [vmem:[%s1 + $0x17c] sm:$0xf]
  %v143 = vld [vmem:[%s1 + $0x180] sm:$0xf]
  %v144 = vld [vmem:[%s1 + $0x184] sm:$0xf]
  %v145 = vld [vmem:[%s1 + $0x188] sm:$0xf]
  %v146 = vld [vmem:[%s1 + $0x18c] sm:$0xf]
  %v147 = vld [vmem:[%s1 + $0x190] sm:$0xf]
  %v148 = vld [vmem:[%s1 + $0x194] sm:$0xf]
  %v149 = vld [vmem:[%s1 + $0x198] sm:$0xf]
  %v150 = vld [vmem:[%s1 + $0x19c] sm:$0xf]
  %v151 = vld [vmem:[%s1 + $0x1a0] sm:$0xf]
  %v152 = vld [vmem:[%s1 + $0x1a4] sm:$0xf]
  %v153 = vld [vmem:[%s1 + $0x1a8] sm:$0xf]
  %v154 = vld [vmem:[%s1 + $0x1ac] sm:$0xf]
  %v155 = vld [vmem:[%s1 + $0x1b0] sm:$0xf]
  %v156 = vld [vmem:[%s1 + $0x1b4] sm:$0xf]
  %v157 = vld [vmem:[%s1 + $0x1b8] sm:$0xf]
  %v158 = vld [vmem:[%s1 + $0x1bc] sm:$0xf]
  %v159 = vld [vmem:[%s1 + $0x1c0] sm:$0xf]
  %v160 = vld [vmem:[%s1 + $0x1c4] sm:$0xf]
  %v161 = vld [vmem:[%s1 + $0x1c8] sm:$0xf]
  %v162 = vld [vmem:[%s1 + $0x1cc] sm:$0xf]
  %v163 = vld [vmem:[%s1 + $0x1d0] sm:$0xf]
  %v164 = vld [vmem:[%s1 + $0x1d4] sm:$0xf]
  %v165 = vld [vmem:[%s1 + $0x1d8] sm:$0xf]
  %v166 = vld [vmem:[%s1 + $0x1dc] sm:$0xf]
  %v167 = vld [vmem:[%s1 + $0x1e0] sm:$0xf]
  %v168 = vld [vmem:[%s1 + $0x1e4] sm:$0xf]
  %v169 = vld [vmem:[%s1 + $0x1e8] sm:$0xf]
  %v170 = vld [vmem:[%s1 + $0x1ec] sm:$0xf]
  %v171 = vld [vmem:[%s1 + $0x1f0] sm:$0xf]
  %v172 = vld [vmem:[%s1 + $0x1f4] sm:$0xf]
  %v173 = vld [vmem:[%s1 + $0x1f8] sm:$0xf]
  %v174 = vld [vmem:[%s1 + $0x1fc] sm:$0xf]
  %v175 = vld [vmem:[%s1 + $0x200] sm:$0xf]
  %v176 = vld [vmem:[%s1 + $0x204] sm:$0xf]
  %v177 = vld [vmem:[%s1 + $0x208] sm:$0xf]
  %v178 = vld [vmem:[%s1 + $0x20c] sm:$0xf]
  %v179 = vld [vmem:[%s1 + $0x210] sm:$0xf]
  %v180 = vld [vmem:[%s1 + $0x214] sm:$0xf]
  %v181 = vld [vmem:[%s1 + $0x218] sm:$0xf]
  %v182 = vld [vmem:[%s1 + $0x21c] sm:$0xf]
  %v183 = vld [vmem:[%s1 + $0x220] sm:$0xf]
  %v184 = vld [vmem:[%s1 + $0x224] sm:$0xf]
  %v185 = vld [vmem:[%s1 + $0x228] sm:$0xf]
  %v186 = vld [vmem:[%s1 + $0x22c] sm:$0xf]
  %v187 = vld [vmem:[%s1 + $0x230] sm:$0xf]
  %v188 = vld [vmem:[%s1 + $0x234] sm:$0xf]
  %v189 = vld [vmem:[%s1 + $0x238] sm:$0xf]
  %v190 = vld [vmem:[%s1 + $0x23c] sm:$0xf]
  %v191 = vld [vmem:[%s1 + $0x240] sm:$0xf]
  %v192 = vld [vmem:[%s1 + $0x244] sm:$0xf]
  %v193 = vld [vmem:[%s1 + $0x248] sm:$0xf]
  %v194 = vld [vmem:[%s1 + $0x24c] sm:$0xf]
  %v195 = vld [vmem:[%s1 + $0x250] sm:$0xf]
  %v196 = vld [vmem:[%s1 + $0x254] sm:$0xf]
  %v197 = vld [vmem:[%s1 + $0x258] sm:$0xf]
  %v198 = vld [vmem:[%s1 + $0x25c] sm:$0xf]
  %v199 = vld [vmem:[%s1 + $0x260] sm:$0xf]
  %v200 = vld [vmem:[%s1 + $0x264] sm:$0xf]
  %v201 = vld [vmem:[%s1 + $0x268] sm:$0xf]
  %v202 = vld [vmem:[%s1 + $0x26c] sm:$0xf]
  %v203 = vld [vmem:[%s1 + $0x270] sm:$0xf]
  %v204 = vld [vmem:[%s1 + $0x274] sm:$0xf]
  %v205 = vld [vmem:[%s1 + $0x278] sm:$0xf]
  %v206 = vld [vmem:[%s1 + $0x27c] sm:$0xf]
  %v207 = vld [vmem:[%s1 + $0x280] sm:$0xf]
  %v208 = vld [vmem:[%s1 + $0x284] sm:$0xf]
  %v209 = vld [vmem:[%s1 + $0x288] sm:$0xf]
  %v210 = vld [vmem:[%s1 + $0x28c] sm:$0xf]
  %v211 = vld [vmem:[%s1 + $0x290] sm:$0xf]
  %v212 = vld [vmem:[%s1 + $0x294] sm:$0xf]
  %v213 = vld [vmem:[%s1 + $0x298] sm:$0xf]
  %v214 = vld [vmem:[%s1 + $0x29c] sm:$0xf]
  %v215 = vld [vmem:[%s1 + $0x2a0] sm:$0xf]
  %v216 = vld [vmem:[%s1 + $0x2a4] sm:$0xf]
  %v217 = vld [vmem:[%s1 + $0x2a8] sm:$0xf]
  %v218 = vld [vmem:[%s1 + $0x2ac] sm:$0xf]
  %v219 = vld [vmem:[%s1 + $0x2b0] sm:$0xf]
  %v220 = vld [vmem:[%s1 + $0x2b4] sm:$0xf]
  %v221 = vld [vmem:[%s1 + $0x2b8] sm:$0xf]
  %v222 = vld [vmem:[%s1 + $0x2bc] sm:$0xf]
  %v223 = vld [vmem:[%s1 + $0x2c0] sm:$0xf]
  %v224 = vld [vmem:[%s1 + $0x2c4] sm:$0xf]
  %v225 = vld [vmem:[%s1 + $0x2c8] sm:$0xf]
  %v226 = vld [vmem:[%s1 + $0x2cc] sm:$0xf]
  %v227 = vld [vmem:[%s1 + $0x2d0] sm:$0xf]
  %v228 = vld [vmem:[%s1 + $0x2d4] sm:$0xf]
  %v229 = vld [vmem:[%s1 + $0x2d8] sm:$0xf]
  %v230 = vld [vmem:[%s1 + $0x2dc] sm:$0xf]
  %v231 = vld [vmem:[%s1 + $0x2e0] sm:$0xf]
  %v232 = vld [vmem:[%s1 + $0x2e4] sm:$0xf]
  %v233 = vld [vmem:[%s1 + $0x2e8] sm:$0xf]
  %v234 = vld [vmem:[%s1 + $0x2ec] sm:$0xf]
  %v235 = vld [vmem:[%s1 + $0x2f0] sm:$0xf]
  %v236 = vld [vmem:[%s1 + $0x2f4] sm:$0xf]
  %v237 = vld [vmem:[%s1 + $0x2f8] sm:$0xf]
  %v238 = vld [vmem:[%s1 + $0x2fc] sm:$0xf]
  %v239 = vld [vmem:[%s1 + $0x300] sm:$0xf]
  %v240 = vld [vmem:[%s1 + $0x304] sm:$0xf]
  %v241 = vld [vmem:[%s1 + $0x308] sm:$0xf]
  %v242 = vld [vmem:[%s1 + $0x30c] sm:$0xf]
  %v243 = vld [vmem:[%s1 + $0x310] sm:$0xf]
  %v244 = vld [vmem:[%s1 + $0x314] sm:$0xf]
  %v245 = vld [vmem:[%s1 + $0x318] sm:$0xf]
  %v246 = vld [vmem:[%s1 + $0x31c] sm:$0xf]
  %v247 = vld [vmem:[%s2] sm:$0x1]
  %v249 = vperm.slane %v247, 0
  %v451 = vunpack.c.l.b16 %v47
  %v452 = vunpack.c.l.b16 %v48
  %v453 = vunpack.c.l.b16 %v49
  %v454 = vunpack.c.l.b16 %v50
  %v455 = vunpack.c.l.b16 %v51
  %v456 = vunpack.c.l.b16 %v52
  %v457 = vunpack.c.l.b16 %v53
  %v458 = vunpack.c.l.b16 %v54
  %v459 = vunpack.c.l.b16 %v55
  %v460 = vunpack.c.l.b16 %v56
  %v461 = vunpack.c.l.b16 %v57
  %v462 = vunpack.c.l.b16 %v58
  %v463 = vunpack.c.l.b16 %v59
  %v464 = vunpack.c.l.b16 %v60
  %v465 = vunpack.c.l.b16 %v61
  %v466 = vunpack.c.l.b16 %v62
  %v467 = vunpack.c.l.b16 %v63
  %v468 = vunpack.c.l.b16 %v64
  %v469 = vunpack.c.l.b16 %v65
  %v470 = vunpack.c.l.b16 %v66
  %v471 = vunpack.c.l.b16 %v67
  %v472 = vunpack.c.l.b16 %v68
  %v473 = vunpack.c.l.b16 %v69
  %v474 = vunpack.c.l.b16 %v70
  %v475 = vunpack.c.l.b16 %v71
  %v476 = vunpack.c.l.b16 %v72
  %v477 = vunpack.c.l.b16 %v73
  %v478 = vunpack.c.l.b16 %v74
  %v479 = vunpack.c.l.b16 %v75
  %v480 = vunpack.c.l.b16 %v76
  %v481 = vunpack.c.l.b16 %v77
  %v482 = vunpack.c.l.b16 %v78
  %v483 = vunpack.c.l.b16 %v79
  %v484 = vunpack.c.l.b16 %v80
  %v485 = vunpack.c.l.b16 %v81
  %v486 = vunpack.c.l.b16 %v82
  %v487 = vunpack.c.l.b16 %v83
  %v488 = vunpack.c.l.b16 %v84
  %v489 = vunpack.c.l.b16 %v85
  %v490 = vunpack.c.l.b16 %v86
  %v491 = vunpack.c.l.b16 %v87
  %v492 = vunpack.c.l.b16 %v88
  %v493 = vunpack.c.l.b16 %v89
  %v494 = vunpack.c.l.b16 %v90
  %v495 = vunpack.c.l.b16 %v91
  %v496 = vunpack.c.l.b16 %v92
  %v497 = vunpack.c.l.b16 %v93
  %v498 = vunpack.c.l.b16 %v94
  %v499 = vunpack.c.l.b16 %v95
  %v500 = vunpack.c.l.b16 %v96
  %v501 = vunpack.c.l.b16 %v97
  %v502 = vunpack.c.l.b16 %v98
  %v503 = vunpack.c.l.b16 %v99
  %v504 = vunpack.c.l.b16 %v100
  %v505 = vunpack.c.l.b16 %v101
  %v506 = vunpack.c.l.b16 %v102
  %v507 = vunpack.c.l.b16 %v103
  %v508 = vunpack.c.l.b16 %v104
  %v509 = vunpack.c.l.b16 %v105
  %v510 = vunpack.c.l.b16 %v106
  %v511 = vunpack.c.l.b16 %v107
  %v512 = vunpack.c.l.b16 %v108
  %v513 = vunpack.c.l.b16 %v109
  %v514 = vunpack.c.l.b16 %v110
  %v515 = vunpack.c.l.b16 %v111
  %v516 = vunpack.c.l.b16 %v112
  %v517 = vunpack.c.l.b16 %v113
  %v518 = vunpack.c.l.b16 %v114
  %v519 = vunpack.c.l.b16 %v115
  %v520 = vunpack.c.l.b16 %v116
  %v521 = vunpack.c.l.b16 %v117
  %v522 = vunpack.c.l.b16 %v118
  %v523 = vunpack.c.l.b16 %v119
  %v524 = vunpack.c.l.b16 %v120
  %v525 = vunpack.c.l.b16 %v121
  %v526 = vunpack.c.l.b16 %v122
  %v527 = vunpack.c.l.b16 %v123
  %v528 = vunpack.c.l.b16 %v124
  %v529 = vunpack.c.l.b16 %v125
  %v530 = vunpack.c.l.b16 %v126
  %v531 = vunpack.c.l.b16 %v127
  %v532 = vunpack.c.l.b16 %v128
  %v533 = vunpack.c.l.b16 %v129
  %v534 = vunpack.c.l.b16 %v130
  %v535 = vunpack.c.l.b16 %v131
  %v536 = vunpack.c.l.b16 %v132
  %v537 = vunpack.c.l.b16 %v133
  %v538 = vunpack.c.l.b16 %v134
  %v539 = vunpack.c.l.b16 %v135
  %v540 = vunpack.c.l.b16 %v136
  %v541 = vunpack.c.l.b16 %v137
  %v542 = vunpack.c.l.b16 %v138
  %v543 = vunpack.c.l.b16 %v139
  %v544 = vunpack.c.l.b16 %v140
  %v545 = vunpack.c.l.b16 %v141
  %v546 = vunpack.c.l.b16 %v142
  %v547 = vunpack.c.l.b16 %v143
  %v548 = vunpack.c.l.b16 %v144
  %v549 = vunpack.c.l.b16 %v145
  %v550 = vunpack.c.l.b16 %v146
  %v551 = vunpack.c.l.b16 %v147
  %v552 = vunpack.c.l.b16 %v148
  %v553 = vunpack.c.l.b16 %v149
  %v554 = vunpack.c.l.b16 %v150
  %v555 = vunpack.c.l.b16 %v151
  %v556 = vunpack.c.l.b16 %v152
  %v557 = vunpack.c.l.b16 %v153
  %v558 = vunpack.c.l.b16 %v154
  %v559 = vunpack.c.l.b16 %v155
  %v560 = vunpack.c.l.b16 %v156
  %v561 = vunpack.c.l.b16 %v157
  %v562 = vunpack.c.l.b16 %v158
  %v563 = vunpack.c.l.b16 %v159
  %v564 = vunpack.c.l.b16 %v160
  %v565 = vunpack.c.l.b16 %v161
  %v566 = vunpack.c.l.b16 %v162
  %v567 = vunpack.c.l.b16 %v163
  %v568 = vunpack.c.l.b16 %v164
  %v569 = vunpack.c.l.b16 %v165
  %v570 = vunpack.c.l.b16 %v166
  %v571 = vunpack.c.l.b16 %v167
  %v572 = vunpack.c.l.b16 %v168
  %v573 = vunpack.c.l.b16 %v169
  %v574 = vunpack.c.l.b16 %v170
  %v575 = vunpack.c.l.b16 %v171
  %v576 = vunpack.c.l.b16 %v172
  %v577 = vunpack.c.l.b16 %v173
  %v578 = vunpack.c.l.b16 %v174
  %v579 = vunpack.c.l.b16 %v175
  %v580 = vunpack.c.l.b16 %v176
  %v581 = vunpack.c.l.b16 %v177
  %v582 = vunpack.c.l.b16 %v178
  %v583 = vunpack.c.l.b16 %v179
  %v584 = vunpack.c.l.b16 %v180
  %v585 = vunpack.c.l.b16 %v181
  %v586 = vunpack.c.l.b16 %v182
  %v587 = vunpack.c.l.b16 %v183
  %v588 = vunpack.c.l.b16 %v184
  %v589 = vunpack.c.l.b16 %v185
  %v590 = vunpack.c.l.b16 %v186
  %v591 = vunpack.c.l.b16 %v187
  %v592 = vunpack.c.l.b16 %v188
  %v593 = vunpack.c.l.b16 %v189
  %v594 = vunpack.c.l.b16 %v190
  %v595 = vunpack.c.l.b16 %v191
  %v596 = vunpack.c.l.b16 %v192
  %v597 = vunpack.c.l.b16 %v193
  %v598 = vunpack.c.l.b16 %v194
  %v599 = vunpack.c.l.b16 %v195
  %v600 = vunpack.c.l.b16 %v196
  %v601 = vunpack.c.l.b16 %v197
  %v602 = vunpack.c.l.b16 %v198
  %v603 = vunpack.c.l.b16 %v199
  %v604 = vunpack.c.l.b16 %v200
  %v605 = vunpack.c.l.b16 %v201
  %v606 = vunpack.c.l.b16 %v202
  %v607 = vunpack.c.l.b16 %v203
  %v608 = vunpack.c.l.b16 %v204
  %v609 = vunpack.c.l.b16 %v205
  %v610 = vunpack.c.l.b16 %v206
  %v611 = vunpack.c.l.b16 %v207
  %v612 = vunpack.c.l.b16 %v208
  %v613 = vunpack.c.l.b16 %v209
  %v614 = vunpack.c.l.b16 %v210
  %v615 = vunpack.c.l.b16 %v211
  %v616 = vunpack.c.l.b16 %v212
  %v617 = vunpack.c.l.b16 %v213
  %v618 = vunpack.c.l.b16 %v214
  %v619 = vunpack.c.l.b16 %v215
  %v620 = vunpack.c.l.b16 %v216
  %v621 = vunpack.c.l.b16 %v217
  %v622 = vunpack.c.l.b16 %v218
  %v623 = vunpack.c.l.b16 %v219
  %v624 = vunpack.c.l.b16 %v220
  %v625 = vunpack.c.l.b16 %v221
  %v626 = vunpack.c.l.b16 %v222
  %v627 = vunpack.c.l.b16 %v223
  %v628 = vunpack.c.l.b16 %v224
  %v629 = vunpack.c.l.b16 %v225
  %v630 = vunpack.c.l.b16 %v226
  %v631 = vunpack.c.l.b16 %v227
  %v632 = vunpack.c.l.b16 %v228
  %v633 = vunpack.c.l.b16 %v229
  %v634 = vunpack.c.l.b16 %v230
  %v635 = vunpack.c.l.b16 %v231
  %v636 = vunpack.c.l.b16 %v232
  %v637 = vunpack.c.l.b16 %v233
  %v638 = vunpack.c.l.b16 %v234
  %v639 = vunpack.c.l.b16 %v235
  %v640 = vunpack.c.l.b16 %v236
  %v641 = vunpack.c.l.b16 %v237
  %v642 = vunpack.c.l.b16 %v238
  %v643 = vunpack.c.l.b16 %v239
  %v644 = vunpack.c.l.b16 %v240
  %v645 = vunpack.c.l.b16 %v241
  %v646 = vunpack.c.l.b16 %v242
  %v647 = vunpack.c.l.b16 %v243
  %v648 = vunpack.c.l.b16 %v244
  %v649 = vunpack.c.l.b16 %v245
  %v650 = vunpack.c.l.b16 %v246
  %v651 = vpack.c.b16 %v452, %v451
  %v652 = vpack.c.b16 %v454, %v453
  %v653 = vpack.c.b16 %v456, %v455
  %v654 = vpack.c.b16 %v458, %v457
  %v655 = vpack.c.b16 %v460, %v459
  %v656 = vpack.c.b16 %v462, %v461
  %v657 = vpack.c.b16 %v464, %v463
  %v658 = vpack.c.b16 %v466, %v465
  %v659 = vpack.c.b16 %v468, %v467
  %v660 = vpack.c.b16 %v470, %v469
  %v661 = vpack.c.b16 %v472, %v471
  %v662 = vpack.c.b16 %v474, %v473
  %v663 = vpack.c.b16 %v476, %v475
  %v664 = vpack.c.b16 %v478, %v477
  %v665 = vpack.c.b16 %v480, %v479
  %v666 = vpack.c.b16 %v482, %v481
  %v667 = vpack.c.b16 %v484, %v483
  %v668 = vpack.c.b16 %v486, %v485
  %v669 = vpack.c.b16 %v488, %v487
  %v670 = vpack.c.b16 %v490, %v489
  %v671 = vpack.c.b16 %v492, %v491
  %v672 = vpack.c.b16 %v494, %v493
  %v673 = vpack.c.b16 %v496, %v495
  %v674 = vpack.c.b16 %v498, %v497
  %v675 = vpack.c.b16 %v500, %v499
  %v676 = vpack.c.b16 %v502, %v501
  %v677 = vpack.c.b16 %v504, %v503
  %v678 = vpack.c.b16 %v506, %v505
  %v679 = vpack.c.b16 %v508, %v507
  %v680 = vpack.c.b16 %v510, %v509
  %v681 = vpack.c.b16 %v512, %v511
  %v682 = vpack.c.b16 %v514, %v513
  %v683 = vpack.c.b16 %v516, %v515
  %v684 = vpack.c.b16 %v518, %v517
  %v685 = vpack.c.b16 %v520, %v519
  %v686 = vpack.c.b16 %v522, %v521
  %v687 = vpack.c.b16 %v524, %v523
  %v688 = vpack.c.b16 %v526, %v525
  %v689 = vpack.c.b16 %v528, %v527
  %v690 = vpack.c.b16 %v530, %v529
  %v691 = vpack.c.b16 %v532, %v531
  %v692 = vpack.c.b16 %v534, %v533
  %v693 = vpack.c.b16 %v536, %v535
  %v694 = vpack.c.b16 %v538, %v537
  %v695 = vpack.c.b16 %v540, %v539
  %v696 = vpack.c.b16 %v542, %v541
  %v697 = vpack.c.b16 %v544, %v543
  %v698 = vpack.c.b16 %v546, %v545
  %v699 = vpack.c.b16 %v548, %v547
  %v700 = vpack.c.b16 %v550, %v549
  %v701 = vpack.c.b16 %v552, %v551
  %v702 = vpack.c.b16 %v554, %v553
  %v703 = vpack.c.b16 %v556, %v555
  %v704 = vpack.c.b16 %v558, %v557
  %v705 = vpack.c.b16 %v560, %v559
  %v706 = vpack.c.b16 %v562, %v561
  %v707 = vpack.c.b16 %v564, %v563
  %v708 = vpack.c.b16 %v566, %v565
  %v709 = vpack.c.b16 %v568, %v567
  %v710 = vpack.c.b16 %v570, %v569
  %v711 = vpack.c.b16 %v572, %v571
  %v712 = vpack.c.b16 %v574, %v573
  %v713 = vpack.c.b16 %v576, %v575
  %v714 = vpack.c.b16 %v578, %v577
  %v715 = vpack.c.b16 %v580, %v579
  %v716 = vpack.c.b16 %v582, %v581
  %v717 = vpack.c.b16 %v584, %v583
  %v718 = vpack.c.b16 %v586, %v585
  %v719 = vpack.c.b16 %v588, %v587
  %v720 = vpack.c.b16 %v590, %v589
  %v721 = vpack.c.b16 %v592, %v591
  %v722 = vpack.c.b16 %v594, %v593
  %v723 = vpack.c.b16 %v596, %v595
  %v724 = vpack.c.b16 %v598, %v597
  %v725 = vpack.c.b16 %v600, %v599
  %v726 = vpack.c.b16 %v602, %v601
  %v727 = vpack.c.b16 %v604, %v603
  %v728 = vpack.c.b16 %v606, %v605
  %v729 = vpack.c.b16 %v608, %v607
  %v730 = vpack.c.b16 %v610, %v609
  %v731 = vpack.c.b16 %v612, %v611
  %v732 = vpack.c.b16 %v614, %v613
  %v733 = vpack.c.b16 %v616, %v615
  %v734 = vpack.c.b16 %v618, %v617
  %v735 = vpack.c.b16 %v620, %v619
  %v736 = vpack.c.b16 %v622, %v621
  %v737 = vpack.c.b16 %v624, %v623
  %v738 = vpack.c.b16 %v626, %v625
  %v739 = vpack.c.b16 %v628, %v627
  %v740 = vpack.c.b16 %v630, %v629
  %v741 = vpack.c.b16 %v632, %v631
  %v742 = vpack.c.b16 %v634, %v633
  %v743 = vpack.c.b16 %v636, %v635
  %v744 = vpack.c.b16 %v638, %v637
  %v745 = vpack.c.b16 %v640, %v639
  %v746 = vpack.c.b16 %v642, %v641
  %v747 = vpack.c.b16 %v644, %v643
  %v748 = vpack.c.b16 %v646, %v645
  %v749 = vpack.c.b16 %v648, %v647
  %v750 = vpack.c.b16 %v650, %v649
  %vm851 = vcmask 523264
  %v853 = vsel %vm851, %v46, 0
  %855 = vmatpush.bf16.msra.mxu0 %v658
  %856 = vmatpush.bf16.msra.mxu0 %v657
  %857 = vmatpush.bf16.msra.mxu0 %v656
  %858 = vmatpush.bf16.msra.mxu0 %v655
  %859 = vmatpush.bf16.msra.mxu0 %v654
  %860 = vmatpush.bf16.msra.mxu0 %v653
  %861 = vmatpush.bf16.msra.mxu0 %v652
  %862 = vmatpush.bf16.msra.mxu0 %v651
  %863 = vmatmul.bf16.gmra.mxu0 %v34
  %v864 = vpop.f32.mrf.mxu0
  %v865 = vadd.f32 %v249, %v864
  %v866 = vpop.f32.mrf.mxu0
  %867 = vdwg.mxu0
  %868 = vmatpush.bf16.msra.mxu0 %v666
  %869 = vmatpush.bf16.msra.mxu0 %v665
  %870 = vmatpush.bf16.msra.mxu0 %v664
  %871 = vmatpush.bf16.msra.mxu0 %v663
  %872 = vmatpush.bf16.msra.mxu0 %v662
  %873 = vmatpush.bf16.msra.mxu0 %v661
  %874 = vmatpush.bf16.msra.mxu0 %v660
  %875 = vmatpush.bf16.msra.mxu0 %v659
  %876 = vmatmul.bf16.gmra.mxu0 %v35
  %v877 = vpop.f32.mrf.mxu0
  %v878 = vadd.f32 %v865, %v877
  %v879 = vpop.f32.mrf.mxu0
  %880 = vdwg.mxu0
  %881 = vmatpush.bf16.msra.mxu0 %v674
  %882 = vmatpush.bf16.msra.mxu0 %v673
  %883 = vmatpush.bf16.msra.mxu0 %v672
  %884 = vmatpush.bf16.msra.mxu0 %v671
  %885 = vmatpush.bf16.msra.mxu0 %v670
  %886 = vmatpush.bf16.msra.mxu0 %v669
  %887 = vmatpush.bf16.msra.mxu0 %v668
  %888 = vmatpush.bf16.msra.mxu0 %v667
  %889 = vmatmul.bf16.gmra.mxu0 %v36
  %v890 = vpop.f32.mrf.mxu0
  %v891 = vadd.f32 %v878, %v890
  %v892 = vpop.f32.mrf.mxu0
  %893 = vdwg.mxu0
  %894 = vmatpush.bf16.msra.mxu0 %v682
  %895 = vmatpush.bf16.msra.mxu0 %v681
  %896 = vmatpush.bf16.msra.mxu0 %v680
  %897 = vmatpush.bf16.msra.mxu0 %v679
  %898 = vmatpush.bf16.msra.mxu0 %v678
  %899 = vmatpush.bf16.msra.mxu0 %v677
  %900 = vmatpush.bf16.msra.mxu0 %v676
  %901 = vmatpush.bf16.msra.mxu0 %v675
  %902 = vmatmul.bf16.gmra.mxu0 %v37
  %v903 = vpop.f32.mrf.mxu0
  %v904 = vadd.f32 %v891, %v903
  %v905 = vpop.f32.mrf.mxu0
  %906 = vdwg.mxu0
  %907 = vmatpush.bf16.msra.mxu0 %v690
  %908 = vmatpush.bf16.msra.mxu0 %v689
  %909 = vmatpush.bf16.msra.mxu0 %v688
  %910 = vmatpush.bf16.msra.mxu0 %v687
  %911 = vmatpush.bf16.msra.mxu0 %v686
  %912 = vmatpush.bf16.msra.mxu0 %v685
  %913 = vmatpush.bf16.msra.mxu0 %v684
  %914 = vmatpush.bf16.msra.mxu0 %v683
  %915 = vmatmul.bf16.gmra.mxu0 %v38
  %v916 = vpop.f32.mrf.mxu0
  %v917 = vadd.f32 %v904, %v916
  %v918 = vpop.f32.mrf.mxu0
  %919 = vdwg.mxu0
  %920 = vmatpush.bf16.msra.mxu0 %v698
  %921 = vmatpush.bf16.msra.mxu0 %v697
  %922 = vmatpush.bf16.msra.mxu0 %v696
  %923 = vmatpush.bf16.msra.mxu0 %v695
  %924 = vmatpush.bf16.msra.mxu0 %v694
  %925 = vmatpush.bf16.msra.mxu0 %v693
  %926 = vmatpush.bf16.msra.mxu0 %v692
  %927 = vmatpush.bf16.msra.mxu0 %v691
  %928 = vmatmul.bf16.gmra.mxu0 %v39
  %v929 = vpop.f32.mrf.mxu0
  %v930 = vadd.f32 %v917, %v929
  %v931 = vpop.f32.mrf.mxu0
  %932 = vdwg.mxu0
  %933 = vmatpush.bf16.msra.mxu0 %v706
  %934 = vmatpush.bf16.msra.mxu0 %v705
  %935 = vmatpush.bf16.msra.mxu0 %v704
  %936 = vmatpush.bf16.msra.mxu0 %v703
  %937 = vmatpush.bf16.msra.mxu0 %v702
  %938 = vmatpush.bf16.msra.mxu0 %v701
  %939 = vmatpush.bf16.msra.mxu0 %v700
  %940 = vmatpush.bf16.msra.mxu0 %v699
  %941 = vmatmul.bf16.gmra.mxu0 %v40
  %v942 = vpop.f32.mrf.mxu0
  %v943 = vadd.f32 %v930, %v942
  %v944 = vpop.f32.mrf.mxu0
  %945 = vdwg.mxu0
  %946 = vmatpush.bf16.msra.mxu0 %v714
  %947 = vmatpush.bf16.msra.mxu0 %v713
  %948 = vmatpush.bf16.msra.mxu0 %v712
  %949 = vmatpush.bf16.msra.mxu0 %v711
  %950 = vmatpush.bf16.msra.mxu0 %v710
  %951 = vmatpush.bf16.msra.mxu0 %v709
  %952 = vmatpush.bf16.msra.mxu0 %v708
  %953 = vmatpush.bf16.msra.mxu0 %v707
  %954 = vmatmul.bf16.gmra.mxu0 %v41
  %v955 = vpop.f32.mrf.mxu0
  %v956 = vadd.f32 %v943, %v955
  %v957 = vpop.f32.mrf.mxu0
  %958 = vdwg.mxu0
  %959 = vmatpush.bf16.msra.mxu0 %v722
  %960 = vmatpush.bf16.msra.mxu0 %v721
  %961 = vmatpush.bf16.msra.mxu0 %v720
  %962 = vmatpush.bf16.msra.mxu0 %v719
  %963 = vmatpush.bf16.msra.mxu0 %v718
  %964 = vmatpush.bf16.msra.mxu0 %v717
  %965 = vmatpush.bf16.msra.mxu0 %v716
  %966 = vmatpush.bf16.msra.mxu0 %v715
  %967 = vmatmul.bf16.gmra.mxu0 %v42
  %v968 = vpop.f32.mrf.mxu0
  %v969 = vadd.f32 %v956, %v968
  %v970 = vpop.f32.mrf.mxu0
  %971 = vdwg.mxu0
  %972 = vmatpush.bf16.msra.mxu0 %v730
  %973 = vmatpush.bf16.msra.mxu0 %v729
  %974 = vmatpush.bf16.msra.mxu0 %v728
  %975 = vmatpush.bf16.msra.mxu0 %v727
  %976 = vmatpush.bf16.msra.mxu0 %v726
  %977 = vmatpush.bf16.msra.mxu0 %v725
  %978 = vmatpush.bf16.msra.mxu0 %v724
  %979 = vmatpush.bf16.msra.mxu0 %v723
  %980 = vmatmul.bf16.gmra.mxu0 %v43
  %v981 = vpop.f32.mrf.mxu0
  %v982 = vadd.f32 %v969, %v981
  %v983 = vpop.f32.mrf.mxu0
  %984 = vdwg.mxu0
  %985 = vmatpush.bf16.msra.mxu0 %v738
  %986 = vmatpush.bf16.msra.mxu0 %v737
  %987 = vmatpush.bf16.msra.mxu0 %v736
  %988 = vmatpush.bf16.msra.mxu0 %v735
  %989 = vmatpush.bf16.msra.mxu0 %v734
  %990 = vmatpush.bf16.msra.mxu0 %v733
  %991 = vmatpush.bf16.msra.mxu0 %v732
  %992 = vmatpush.bf16.msra.mxu0 %v731
  %993 = vmatmul.bf16.gmra.mxu0 %v44
  %v994 = vpop.f32.mrf.mxu0
  %v995 = vadd.f32 %v982, %v994
  %v996 = vpop.f32.mrf.mxu0
  %997 = vdwg.mxu0
  %998 = vmatpush.bf16.msra.mxu0 %v746
  %999 = vmatpush.bf16.msra.mxu0 %v745
  %1000 = vmatpush.bf16.msra.mxu0 %v744
  %1001 = vmatpush.bf16.msra.mxu0 %v743
  %1002 = vmatpush.bf16.msra.mxu0 %v742
  %1003 = vmatpush.bf16.msra.mxu0 %v741
  %1004 = vmatpush.bf16.msra.mxu0 %v740
  %1005 = vmatpush.bf16.msra.mxu0 %v739
  %1006 = vmatmul.bf16.gmra.mxu0 %v45
  %v1007 = vpop.f32.mrf.mxu0
  %v1008 = vadd.f32 %v995, %v1007
  %v1009 = vpop.f32.mrf.mxu0
  %1010 = vdwg.mxu0
  %1011 = vmatpush.bf16.msra.mxu0 0
  %1012 = vmatpush.bf16.msra.mxu0 0
  %1013 = vmatpush.bf16.msra.mxu0 0
  %1014 = vmatpush.bf16.msra.mxu0 0
  %1015 = vmatpush.bf16.msra.mxu0 %v750
  %1016 = vmatpush.bf16.msra.mxu0 %v749
  %1017 = vmatpush.bf16.msra.mxu0 %v748
  %1018 = vmatpush.bf16.msra.mxu0 %v747
  %1019 = vmatmul.bf16.gmra.mxu0 %v853
  %v1020 = vpop.f32.mrf.mxu0
  %v1021 = vadd.f32 %v1008, %v1020
  %v1022 = vpop.f32.mrf.mxu0
  %1023 = vdwg.mxu0
  %v1024 = vmax.f32 %v1021, 0.0
  %v1025 = vpack.c.bf16 %v1024, %v1024
  %v1026 = vld [vmem:[%s3] sm:$0xf]
  %v1027 = vld [vmem:[%s3 + $0x4] sm:$0xf]
  %v1028 = vld [vmem:[%s3 + $0x8] sm:$0xf]
  %v1029 = vld [vmem:[%s3 + $0xc] sm:$0xf]
  %v1030 = vld [vmem:[%s3 + $0x10] sm:$0xf]
  %v1031 = vld [vmem:[%s3 + $0x14] sm:$0xf]
  %v1032 = vld [vmem:[%s3 + $0x18] sm:$0xf]
  %v1033 = vld [vmem:[%s3 + $0x1c] sm:$0xf]
  %v1034 = vld [vmem:[%s3 + $0x20] sm:$0xf]
  %v1035 = vld [vmem:[%s3 + $0x24] sm:$0xf]
  %v1036 = vld [vmem:[%s3 + $0x28] sm:$0xf]
  %v1037 = vld [vmem:[%s3 + $0x2c] sm:$0xf]
  %v1038 = vld [vmem:[%s3 + $0x30] sm:$0xf]
  %v1039 = vld [vmem:[%s3 + $0x34] sm:$0xf]
  %v1040 = vld [vmem:[%s3 + $0x38] sm:$0xf]
  %v1041 = vld [vmem:[%s3 + $0x3c] sm:$0xf]
  %v1042 = vld [vmem:[%s4] sm:$0x1]
  %v1044 = vperm.slane %v1042, 0
  %v1062 = vunpack.c.l.b16 %v1026
  %v1063 = vunpack.c.l.b16 %v1027
  %v1064 = vunpack.c.l.b16 %v1028
  %v1065 = vunpack.c.l.b16 %v1029
  %v1066 = vunpack.c.l.b16 %v1030
  %v1067 = vunpack.c.l.b16 %v1031
  %v1068 = vunpack.c.l.b16 %v1032
  %v1069 = vunpack.c.l.b16 %v1033
  %v1070 = vunpack.c.l.b16 %v1034
  %v1071 = vunpack.c.l.b16 %v1035
  %v1072 = vunpack.c.l.b16 %v1036
  %v1073 = vunpack.c.l.b16 %v1037
  %v1074 = vunpack.c.l.b16 %v1038
  %v1075 = vunpack.c.l.b16 %v1039
  %v1076 = vunpack.c.l.b16 %v1040
  %v1077 = vunpack.c.l.b16 %v1041
  %v1078 = vpack.c.b16 %v1063, %v1062
  %v1079 = vpack.c.b16 %v1065, %v1064
  %v1080 = vpack.c.b16 %v1067, %v1066
  %v1081 = vpack.c.b16 %v1069, %v1068
  %v1082 = vpack.c.b16 %v1071, %v1070
  %v1083 = vpack.c.b16 %v1073, %v1072
  %v1084 = vpack.c.b16 %v1075, %v1074
  %v1085 = vpack.c.b16 %v1077, %v1076
  %1094 = vmatpush.bf16.msra.mxu0 %v1085
  %1095 = vmatpush.bf16.msra.mxu0 %v1084
  %1096 = vmatpush.bf16.msra.mxu0 %v1083
  %1097 = vmatpush.bf16.msra.mxu0 %v1082
  %1098 = vmatpush.bf16.msra.mxu0 %v1081
  %1099 = vmatpush.bf16.msra.mxu0 %v1080
  %1100 = vmatpush.bf16.msra.mxu0 %v1079
  %1101 = vmatpush.bf16.msra.mxu0 %v1078
  %1102 = vmatmul.bf16.gmra.mxu0 %v1025
  %v1103 = vpop.f32.mrf.mxu0
  %v1104 = vadd.f32 %v1044, %v1103
  %v1105 = vpop.f32.mrf.mxu0
  %1106 = vdwg.mxu0
  %1107 = vst [vmem:[%s5] sm:$0xff] %v1104
  // Predicated region
  $region22: #{cnn_forward.5} parent=0 // pred_check
    _
  $region23: #{cnn_forward.5} parent=0 // pred_check_branch
    %1109 = sbr.rel (0) target = $region25
  $region24: #{cnn_forward.5} parent=0 // pred_region
    _
  $region25: #{cnn_forward.5} parent=0 // pred_fallthru
    _
  // Predicated region
  $region26: #{cnn_forward.5} parent=0 // pred_check
    _
  $region27: #{cnn_forward.5} parent=0 // pred_check_branch
    %1111 = sbr.rel (0) target = $region29
  $region28: #{cnn_forward.5} parent=0 // pred_region
    _
  $region29: #{cnn_forward.5} parent=0 // pred_fallthru
    _

</llo_original>
